<compile_context>
chip_gen: v7x
topology: tpu7x:2x2x1
jax: 0.10.0
libtpu: 0.0.40
codegen_flags: <defaults>
</compile_context>

<pallas_src>
import jax
import jax.numpy as jnp
import numpy as np
from jax.experimental import pallas as pl
from jax.experimental.pallas import tpu as pltpu


# ----------------------------------------------------------------------------
# Pallas kernel: per-chunk fused input projection + masked forward GRU
# recurrence (fori_loop) + one-shot backward cell at the last grid step.
# ----------------------------------------------------------------------------
def _bigru_last_kernel(len_ref, x_ref, wih_ref, bif_ref, whh_ref, bhn_f_ref,
                       xb_ref, bhn_b_ref, out_ref, h_ref, proj_ref):
    TB, G = proj_ref.shape          # TB = t_chunk * Bp, G = 3H
    Bp, H = h_ref.shape
    t_chunk = TB // Bp
    c = pl.program_id(0)

    @pl.when(c == 0)
    def _():
        h_ref[...] = jnp.zeros_like(h_ref)

    # Chunk-level input projection: ONE MXU-friendly matmul (M = t_chunk*Bp),
    # result stays resident in VMEM (never round-trips through HBM).
    # r,z biases (input + hidden) and b_in are pre-folded into bif_ref.
    # TODO(synk): on v6e/v7x this matmul could run in bf16 (f32 accumulate);
    #             kept f32 so the recurrence matches the f32 reference exactly.
    proj_ref[...] = (jnp.dot(x_ref[...], wih_ref[...],
                             preferred_element_type=jnp.float32)
                     + jnp.broadcast_to(bif_ref[...], (TB, G)))

    # Hoisted loads / broadcasts (constant across the in-kernel time loop).
    lengths = len_ref[...]                                  # [Bp, 1] int32
    whh = whh_ref[...]                                      # [H, 3H] fused (r|z|n)
    bhn_f = jnp.broadcast_to(bhn_f_ref[...], (Bp, H))       # [Bp, H]
    t0 = c * t_chunk

    def step(s, h):
        row = pl.multiple_of(s * Bp, 8)                     # Bp % 8 == 0
        xg = proj_ref[pl.ds(row, Bp), :]                    # [Bp, 3H]
        hg = jnp.dot(h, whh, preferred_element_type=jnp.float32)   # [Bp, 3H]
        rz = jax.nn.sigmoid(xg[:, :2 * H] + hg[:, :2 * H])
        r = rz[:, :H]
        z = rz[:, H:]
        n = jnp.tanh(xg[:, 2 * H:] + r * (hg[:, 2 * H:] + bhn_f))
        h_new = (1.0 - z) * n + z * h
        # Packed-sequence semantics: rows with t >= len keep their hidden state.
        active = (t0 + s) < lengths                         # [Bp, 1] -> broadcasts
        return jnp.where(active, h_new, h)

    h_ref[...] = jax.lax.fori_loop(0, t_chunk, step, h_ref[...],
                                   unroll=True if t_chunk <= 32 else 8)

    @pl.when(c == pl.num_programs(0) - 1)
    def _():
        # Forward half: final forward hidden state (== output at t = len-1).
        out_ref[:, :H] = h_ref[...]
        # Backward half: one GRU-cell step on x[len-1] with h0 = 0
        # (h @ W_hh_b vanishes; only biases remain, pre-folded in the wrapper).
        xb = xb_ref[...]                                    # [Bp, 3H]
        rz_b = jax.nn.sigmoid(xb[:, :2 * H])
        r_b = rz_b[:, :H]
        z_b = rz_b[:, H:]
        n_b = jnp.tanh(xb[:, 2 * H:] +
                       r_b * jnp.broadcast_to(bhn_b_ref[...], (Bp, H)))
        out_ref[:, H:] = (1.0 - z_b) * n_b


# ----------------------------------------------------------------------------
# Wrapper: padding, weight fusion, bias folding, chunk sizing.
# ----------------------------------------------------------------------------
def _fuse_gate_weights(w):
    """[3, H_in, H_out] (gate order r,z,n) -> [H_in, 3*H_out] fused along lanes."""
    return jnp.transpose(w, (1, 0, 2)).reshape(w.shape[1], 3 * w.shape[2])


def _flatten_bias(b):
    """[3, 1, H] -> [1, 3H] (r | z | n along lanes)."""
    return b.reshape(1, 3 * b.shape[-1])


def gru_with_padding(inputs_list, params, *, t_chunk=None):
    """JAX/Pallas equivalent of GRUWithPadding.forward.

    inputs_list: list of float32 arrays [L_b, H]
    params: dict with 'wih_f','whh_f','bih_f','bhh_f','wih_b','whh_b','bih_b','bhh_b'
            (wih/whh: [3, H, H] so that x @ w[g] is the gate projection,
             biases: [3, 1, H]; gate order r, z, n)
    returns: [B, 2*H]
    """
    B = len(inputs_list)
    H = int(params["wih_f"].shape[-1])
    G = 3 * H
    Bp = max(8, ((B + 7) // 8) * 8)         # sublane-full batch tiles

    lengths = np.zeros((Bp,), dtype=np.int32)
    for b, seq in enumerate(inputs_list):
        lengths[b] = int(np.asarray(seq).shape[0])
    T = int(lengths.max())

    # Time-chunk sizing: double-buffered x chunk (2*Bp*H*4) + projection scratch
    # (Bp*3H*4) per step, capped at ~8 MiB so everything (plus resident weights)
    # fits comfortably in scoped VMEM on every generation (incl. v7x 64 MiB).
    if t_chunk is None:
        bytes_per_step = 20 * Bp * H
        t_chunk = max(1, min(T, (8 << 20) // max(bytes_per_step, 1)))
    n_chunks = int(pl.cdiv(T, t_chunk))
    T_pad = n_chunks * t_chunk

    # Pad to time-major [T_pad, Bp, H]; flatten to [T_pad*Bp, H] so the kernel
    # can take lane-/sublane-aligned row slices with no in-kernel reshapes.
    x_pad = np.zeros((T_pad, Bp, H), dtype=np.float32)
    x_last = np.zeros((Bp, H), dtype=np.float32)
    for b, seq in enumerate(inputs_list):
        s = np.asarray(seq, dtype=np.float32)
        x_pad[: s.shape[0], b, :] = s
        x_last[b] = s[-1]
    x_flat = jnp.asarray(x_pad.reshape(T_pad * Bp, H))
    x_last = jnp.asarray(x_last)
    len_arr = jnp.asarray(lengths).reshape(Bp, 1)

    # Fuse gate weights and flatten / pre-fold biases.
    wih_f = _fuse_gate_weights(params["wih_f"])
    whh_f = _fuse_gate_weights(params["whh_f"])
    bih_f = _flatten_bias(params["bih_f"])
    bhh_f = _flatten_bias(params["bhh_f"])
    wih_b = _fuse_gate_weights(params["wih_b"])
    bih_b = _flatten_bias(params["bih_b"])
    bhh_b = _flatten_bias(params["bhh_b"])

    # r,z biases (input + hidden) fold into the input projection; n keeps b_hh_n.
    b_fold_f = jnp.concatenate(
        [bih_f[:, :2 * H] + bhh_f[:, :2 * H], bih_f[:, 2 * H:]], axis=1)
    bhn_f = bhh_f[:, 2 * H:]                                  # [1, H]
    b_fold_b = jnp.concatenate(
        [bih_b[:, :2 * H] + bhh_b[:, :2 * H], bih_b[:, 2 * H:]], axis=1)
    bhn_b = bhh_b[:, 2 * H:]                                  # [1, H]

    # Backward direction's single-step input projection on x[len-1] (tiny).
    xb_gates = (jnp.dot(x_last, wih_b, preferred_element_type=jnp.float32)
                + b_fold_b)                                   # [Bp, 3H]

    full = lambda shape: pl.BlockSpec(shape, lambda c: (0,) * len(shape))

    grid_spec = pltpu.PrefetchScalarGridSpec(
        num_scalar_prefetch=0,
        grid=(n_chunks,),
        in_specs=[
            full((Bp, 1)),                                        # lengths
            pl.BlockSpec((t_chunk * Bp, H), lambda c: (c, 0)),    # raw x chunk rows
            full((H, G)),                                         # W_ih fused (fwd)
            full((1, G)),                                         # folded input bias (fwd)
            full((H, G)),                                         # W_hh fused (fwd)
            full((1, H)),                                         # b_hh_n (fwd)
            full((Bp, G)),                                        # backward pre-activation
            full((1, H)),                                         # b_hh_n (bwd)
        ],
        out_specs=pl.BlockSpec((Bp, 2 * H), lambda c: (0, 0)),
        scratch_shapes=[
            pltpu.VMEM((Bp, H), jnp.float32),                     # forward hidden carry
            pltpu.VMEM((t_chunk * Bp, G), jnp.float32),           # chunk input projection
        ],
    )

    out = pl.pallas_call(
        _bigru_last_kernel,
        out_shape=jax.ShapeDtypeStruct((Bp, 2 * H), jnp.float32),
        grid_spec=grid_spec,
        compiler_params=pltpu.CompilerParams(
            dimension_semantics=("arbitrary",),
            vmem_limit_bytes=32 * 1024 * 1024),
    )(len_arr, x_flat, wih_f, b_fold_f, whh_f, bhn_f, xb_gates, bhn_b)
    return out[:B]


# ----------------------------------------------------------------------------
# Pure-JAX reference (unfused weights) + deterministic param init.
# ----------------------------------------------------------------------------
def _gru_cell(x_t, h, wih, whh, bih, bhh):
    """PyTorch GRU cell. wih/whh: [3,H,H] (gate order r,z,n), bih/bhh: [3,1,H]."""
    i_r = jnp.dot(x_t, wih[0], preferred_element_type=jnp.float32) + bih[0]
    i_z = jnp.dot(x_t, wih[1], preferred_element_type=jnp.float32) + bih[1]
    i_n = jnp.dot(x_t, wih[2], preferred_element_type=jnp.float32) + bih[2]
    h_r = jnp.dot(h, whh[0], preferred_element_type=jnp.float32) + bhh[0]
    h_z = jnp.dot(h, whh[1], preferred_element_type=jnp.float32) + bhh[1]
    h_n = jnp.dot(h, whh[2], preferred_element_type=jnp.float32) + bhh[2]
    r = jax.nn.sigmoid(i_r + h_r)
    z = jax.nn.sigmoid(i_z + h_z)
    n = jnp.tanh(i_n + r * h_n)
    return (1.0 - z) * n + z * h


def _reference(inputs_list, params):
    outs = []
    H = params["wih_f"].shape[-1]
    for seq in inputs_list:
        seq = jnp.asarray(seq, jnp.float32)
        h = jnp.zeros((1, H), jnp.float32)
        for t in range(seq.shape[0]):
            h = _gru_cell(seq[t:t + 1], h,
                          params["wih_f"], params["whh_f"],
                          params["bih_f"], params["bhh_f"])
        hb = _gru_cell(seq[-1:], jnp.zeros((1, H), jnp.float32),
                       params["wih_b"], params["whh_b"],
                       params["bih_b"], params["bhh_b"])
        outs.append(jnp.concatenate([h, hb], axis=1)[0])
    return jnp.stack(outs, axis=0)


def init_params(key, hidden_size):
    """Deterministic synthetic GRU weights (PyTorch-style uniform init)."""
    H = hidden_size
    k = 1.0 / np.sqrt(H)
    names = ["wih_f", "whh_f", "bih_f", "bhh_f", "wih_b", "whh_b", "bih_b", "bhh_b"]
    shapes = [(3, H, H), (3, H, H), (3, 1, H), (3, 1, H),
              (3, H, H), (3, H, H), (3, 1, H), (3, 1, H)]
    keys = jax.random.split(key, len(names))
    return {n: jax.random.uniform(kk, s, jnp.float32, -k, k)
            for n, s, kk in zip(names, shapes, keys)}


if __name__ == "__main__":
    H = 32                      # config.hidden_size
    key = jax.random.PRNGKey(0)
    pkey, xkey = jax.random.split(key)
    params = init_params(pkey, H)

    # Variable-length input sequences (batch of 4), like the list of tensors
    # fed to GRUWithPadding.forward.
    seq_lens = [5, 8, 3, 6]
    xkeys = jax.random.split(xkey, len(seq_lens))
    inputs = [jax.random.normal(k, (L, H), jnp.float32)
              for k, L in zip(xkeys, seq_lens)]

    out = gru_with_padding(inputs, params)
    out = jax.block_until_ready(out)

    ref = _reference(inputs, params)
    np.testing.assert_allclose(np.asarray(out), np.asarray(ref),
                               rtol=1e-4, atol=1e-4)
    assert out.shape == (len(inputs), 2 * H)
    print("KERNEL_OK")
</pallas_src>

<mosaic_0001>
module attributes {stable_mosaic.version = 11 : i64} {
  func.func @_bigru_last_kernel(%arg0: i32, %arg1: memref<8x1xi32, #tpu.memory_space<vmem>>, %arg2: memref<64x32xf32, #tpu.memory_space<vmem>>, %arg3: memref<32x96xf32, #tpu.memory_space<vmem>>, %arg4: memref<1x96xf32, #tpu.memory_space<vmem>>, %arg5: memref<32x96xf32, #tpu.memory_space<vmem>>, %arg6: memref<1x32xf32, #tpu.memory_space<vmem>>, %arg7: memref<8x96xf32, #tpu.memory_space<vmem>>, %arg8: memref<1x32xf32, #tpu.memory_space<vmem>>, %arg9: memref<8x64xf32, #tpu.memory_space<vmem>>, %arg10: memref<8x32xf32, #tpu.memory_space<vmem>>, %arg11: memref<64x96xf32, #tpu.memory_space<vmem>>) attributes {dimension_semantics = [#tpu.dimension_semantics<arbitrary>], iteration_bounds = array<i64: 1>, scalar_prefetch = 0 : i64, scratch_operands = 2 : i64, tpu.core_type = #tpu.core_type<tc>, window_params = [{pipeline_mode = #tpu.pipeline_mode<synchronous>, transform_indices = @transform_0, window_bounds = array<i64: 8, 1>}, {transform_indices = @transform_1, window_bounds = array<i64: 64, 32>}, {pipeline_mode = #tpu.pipeline_mode<synchronous>, transform_indices = @transform_2, window_bounds = array<i64: 32, 96>}, {pipeline_mode = #tpu.pipeline_mode<synchronous>, transform_indices = @transform_3, window_bounds = array<i64: 1, 96>}, {pipeline_mode = #tpu.pipeline_mode<synchronous>, transform_indices = @transform_4, window_bounds = array<i64: 32, 96>}, {pipeline_mode = #tpu.pipeline_mode<synchronous>, transform_indices = @transform_5, window_bounds = array<i64: 1, 32>}, {pipeline_mode = #tpu.pipeline_mode<synchronous>, transform_indices = @transform_6, window_bounds = array<i64: 8, 96>}, {pipeline_mode = #tpu.pipeline_mode<synchronous>, transform_indices = @transform_7, window_bounds = array<i64: 1, 32>}, {pipeline_mode = #tpu.pipeline_mode<synchronous>, transform_indices = @transform_8, window_bounds = array<i64: 8, 64>}]} {
    %c0_i32 = arith.constant 0 : i32
    %0 = arith.cmpi eq, %arg0, %c0_i32 : i32
    %1 = arith.extui %0 : i1 to i32
    %c0_i32_0 = arith.constant 0 : i32
    %2 = arith.cmpi ne, %1, %c0_i32_0 : i32
    scf.if %2 {
      %cst_62 = arith.constant 0.000000e+00 : f32
      %278 = vector.broadcast %cst_62 : f32 to vector<8x32xf32>
      %c0_63 = arith.constant 0 : index
      %c0_64 = arith.constant 0 : index
      %279 = vector.load %arg10[%c0_63, %c0_64] : memref<8x32xf32, #tpu.memory_space<vmem>>, vector<8x32xf32>
      tpu.vector_store %arg10[%c0_63, %c0_64], %278 {strides = array<i32>} : memref<8x32xf32, #tpu.memory_space<vmem>>, vector<8x32xf32>,
    } else {
    }
    %c0 = arith.constant 0 : index
    %c0_1 = arith.constant 0 : index
    %3 = vector.load %arg2[%c0, %c0_1] : memref<64x32xf32, #tpu.memory_space<vmem>>, vector<64x32xf32>
    %c0_2 = arith.constant 0 : index
    %c0_3 = arith.constant 0 : index
    %4 = vector.load %arg3[%c0_2, %c0_3] : memref<32x96xf32, #tpu.memory_space<vmem>>, vector<32x96xf32>
    %cst = arith.constant dense<0.000000e+00> : vector<64x96xf32>
    %5 = tpu.matmul %3, %4, %cst {dimension_numbers = #tpu.dot_dimension_numbers<[1], [0], [0], [1], [0, 0, 1, 1], [], []>} : vector<64x32xf32>, vector<32x96xf32>, vector<64x96xf32> -> vector<64x96xf32>
    %c0_4 = arith.constant 0 : index
    %c0_5 = arith.constant 0 : index
    %6 = vector.load %arg4[%c0_4, %c0_5] : memref<1x96xf32, #tpu.memory_space<vmem>>, vector<1x96xf32>
    %7 = vector.shape_cast %6 : vector<1x96xf32> to vector<1x96xf32>
    %8 = vector.broadcast %7 : vector<1x96xf32> to vector<64x96xf32>
    %9 = arith.addf %5, %8 : vector<64x96xf32>
    %c0_6 = arith.constant 0 : index
    %c0_7 = arith.constant 0 : index
    %10 = vector.load %arg11[%c0_6, %c0_7] : memref<64x96xf32, #tpu.memory_space<vmem>>, vector<64x96xf32>
    tpu.vector_store %arg11[%c0_6, %c0_7], %9 {strides = array<i32>} : memref<64x96xf32, #tpu.memory_space<vmem>>, vector<64x96xf32>,
    %c0_8 = arith.constant 0 : index
    %c0_9 = arith.constant 0 : index
    %11 = vector.load %arg1[%c0_8, %c0_9] : memref<8x1xi32, #tpu.memory_space<vmem>>, vector<8x1xi32>
    %c0_10 = arith.constant 0 : index
    %c0_11 = arith.constant 0 : index
    %12 = vector.load %arg5[%c0_10, %c0_11] : memref<32x96xf32, #tpu.memory_space<vmem>>, vector<32x96xf32>
    %c0_12 = arith.constant 0 : index
    %c0_13 = arith.constant 0 : index
    %13 = vector.load %arg6[%c0_12, %c0_13] : memref<1x32xf32, #tpu.memory_space<vmem>>, vector<1x32xf32>
    %14 = vector.shape_cast %13 : vector<1x32xf32> to vector<1x32xf32>
    %15 = vector.broadcast %14 : vector<1x32xf32> to vector<8x32xf32>
    %c8_i32 = arith.constant 8 : i32
    %16 = arith.muli %arg0, %c8_i32 : i32
    %c0_14 = arith.constant 0 : index
    %c0_15 = arith.constant 0 : index
    %17 = vector.load %arg10[%c0_14, %c0_15] : memref<8x32xf32, #tpu.memory_space<vmem>>, vector<8x32xf32>
    %c0_i32_16 = arith.constant 0 : i32
    %c8_i32_17 = arith.constant 8 : i32
    %18 = arith.muli %c0_i32_16, %c8_i32_17 : i32
    %19 = tpu.assume_multiple %18, 8 : i32
    %20 = arith.index_cast %19 : i32 to index
    %c0_18 = arith.constant 0 : index
    %21 = vector.load %arg11[%20, %c0_18] : memref<64x96xf32, #tpu.memory_space<vmem>>, vector<8x96xf32>
    %cst_19 = arith.constant dense<0.000000e+00> : vector<8x96xf32>
    %22 = tpu.matmul %17, %12, %cst_19 {dimension_numbers = #tpu.dot_dimension_numbers<[1], [0], [0], [1], [0, 0, 1, 1], [], []>} : vector<8x32xf32>, vector<32x96xf32>, vector<8x96xf32> -> vector<8x96xf32>
    %23 = vector.extract_strided_slice %21 {offsets = [0, 0], sizes = [8, 64], strides = [1, 1]} : vector<8x96xf32> to vector<8x64xf32>
    %24 = vector.extract_strided_slice %22 {offsets = [0, 0], sizes = [8, 64], strides = [1, 1]} : vector<8x96xf32> to vector<8x64xf32>
    %25 = arith.addf %23, %24 : vector<8x64xf32>
    %26 = arith.negf %25 : vector<8x64xf32>
    %27 = math.exp %26 : vector<8x64xf32>
    %cst_20 = arith.constant 1.000000e+00 : f32
    %28 = vector.broadcast %cst_20 : f32 to vector<8x64xf32>
    %29 = arith.addf %28, %27 : vector<8x64xf32>
    %30 = arith.divf %28, %29 : vector<8x64xf32>
    %31 = vector.extract_strided_slice %30 {offsets = [0, 0], sizes = [8, 32], strides = [1, 1]} : vector<8x64xf32> to vector<8x32xf32>
    %32 = vector.extract_strided_slice %30 {offsets = [0, 32], sizes = [8, 32], strides = [1, 1]} : vector<8x64xf32> to vector<8x32xf32>
    %33 = vector.extract_strided_slice %21 {offsets = [0, 64], sizes = [8, 32], strides = [1, 1]} : vector<8x96xf32> to vector<8x32xf32>
    %34 = vector.extract_strided_slice %22 {offsets = [0, 64], sizes = [8, 32], strides = [1, 1]} : vector<8x96xf32> to vector<8x32xf32>
    %35 = arith.addf %34, %15 : vector<8x32xf32>
    %36 = arith.mulf %31, %35 : vector<8x32xf32>
    %37 = arith.addf %33, %36 : vector<8x32xf32>
    %38 = math.tanh %37 : vector<8x32xf32>
    %cst_21 = arith.constant 1.000000e+00 : f32
    %39 = vector.broadcast %cst_21 : f32 to vector<8x32xf32>
    %40 = arith.subf %39, %32 : vector<8x32xf32>
    %41 = arith.mulf %40, %38 : vector<8x32xf32>
    %42 = arith.mulf %32, %17 : vector<8x32xf32>
    %43 = arith.addf %41, %42 : vector<8x32xf32>
    %44 = arith.addi %16, %c0_i32_16 : i32
    %45 = vector.broadcast %44 : i32 to vector<8x1xi32>
    %46 = arith.cmpi slt, %45, %11 : vector<8x1xi32>
    %47 = vector.shape_cast %46 : vector<8x1xi1> to vector<8x1xi1>
    %48 = vector.broadcast %47 : vector<8x1xi1> to vector<8x32xi1>
    %49 = arith.select %48, %43, %17 : vector<8x32xi1>, vector<8x32xf32>
    %c1_i32 = arith.constant 1 : i32
    %c8_i32_22 = arith.constant 8 : i32
    %50 = arith.muli %c1_i32, %c8_i32_22 : i32
    %51 = tpu.assume_multiple %50, 8 : i32
    %52 = arith.index_cast %51 : i32 to index
    %c0_23 = arith.constant 0 : index
    %53 = vector.load %arg11[%52, %c0_23] : memref<64x96xf32, #tpu.memory_space<vmem>>, vector<8x96xf32>
    %cst_24 = arith.constant dense<0.000000e+00> : vector<8x96xf32>
    %54 = tpu.matmul %49, %12, %cst_24 {dimension_numbers = #tpu.dot_dimension_numbers<[1], [0], [0], [1], [0, 0, 1, 1], [], []>} : vector<8x32xf32>, vector<32x96xf32>, vector<8x96xf32> -> vector<8x96xf32>
    %55 = vector.extract_strided_slice %53 {offsets = [0, 0], sizes = [8, 64], strides = [1, 1]} : vector<8x96xf32> to vector<8x64xf32>
    %56 = vector.extract_strided_slice %54 {offsets = [0, 0], sizes = [8, 64], strides = [1, 1]} : vector<8x96xf32> to vector<8x64xf32>
    %57 = arith.addf %55, %56 : vector<8x64xf32>
    %58 = arith.negf %57 : vector<8x64xf32>
    %59 = math.exp %58 : vector<8x64xf32>
    %cst_25 = arith.constant 1.000000e+00 : f32
    %60 = vector.broadcast %cst_25 : f32 to vector<8x64xf32>
    %61 = arith.addf %60, %59 : vector<8x64xf32>
    %62 = arith.divf %60, %61 : vector<8x64xf32>
    %63 = vector.extract_strided_slice %62 {offsets = [0, 0], sizes = [8, 32], strides = [1, 1]} : vector<8x64xf32> to vector<8x32xf32>
    %64 = vector.extract_strided_slice %62 {offsets = [0, 32], sizes = [8, 32], strides = [1, 1]} : vector<8x64xf32> to vector<8x32xf32>
    %65 = vector.extract_strided_slice %53 {offsets = [0, 64], sizes = [8, 32], strides = [1, 1]} : vector<8x96xf32> to vector<8x32xf32>
    %66 = vector.extract_strided_slice %54 {offsets = [0, 64], sizes = [8, 32], strides = [1, 1]} : vector<8x96xf32> to vector<8x32xf32>
    %67 = arith.addf %66, %15 : vector<8x32xf32>
    %68 = arith.mulf %63, %67 : vector<8x32xf32>
    %69 = arith.addf %65, %68 : vector<8x32xf32>
    %70 = math.tanh %69 : vector<8x32xf32>
    %cst_26 = arith.constant 1.000000e+00 : f32
    %71 = vector.broadcast %cst_26 : f32 to vector<8x32xf32>
    %72 = arith.subf %71, %64 : vector<8x32xf32>
    %73 = arith.mulf %72, %70 : vector<8x32xf32>
    %74 = arith.mulf %64, %49 : vector<8x32xf32>
    %75 = arith.addf %73, %74 : vector<8x32xf32>
    %76 = arith.addi %16, %c1_i32 : i32
    %77 = vector.broadcast %76 : i32 to vector<8x1xi32>
    %78 = arith.cmpi slt, %77, %11 : vector<8x1xi32>
    %79 = vector.shape_cast %78 : vector<8x1xi1> to vector<8x1xi1>
    %80 = vector.broadcast %79 : vector<8x1xi1> to vector<8x32xi1>
    %81 = arith.select %80, %75, %49 : vector<8x32xi1>, vector<8x32xf32>
    %c2_i32 = arith.constant 2 : i32
    %c8_i32_27 = arith.constant 8 : i32
    %82 = arith.muli %c2_i32, %c8_i32_27 : i32
    %83 = tpu.assume_multiple %82, 8 : i32
    %84 = arith.index_cast %83 : i32 to index
    %c0_28 = arith.constant 0 : index
    %85 = vector.load %arg11[%84, %c0_28] : memref<64x96xf32, #tpu.memory_space<vmem>>, vector<8x96xf32>
    %cst_29 = arith.constant dense<0.000000e+00> : vector<8x96xf32>
    %86 = tpu.matmul %81, %12, %cst_29 {dimension_numbers = #tpu.dot_dimension_numbers<[1], [0], [0], [1], [0, 0, 1, 1], [], []>} : vector<8x32xf32>, vector<32x96xf32>, vector<8x96xf32> -> vector<8x96xf32>
    %87 = vector.extract_strided_slice %85 {offsets = [0, 0], sizes = [8, 64], strides = [1, 1]} : vector<8x96xf32> to vector<8x64xf32>
    %88 = vector.extract_strided_slice %86 {offsets = [0, 0], sizes = [8, 64], strides = [1, 1]} : vector<8x96xf32> to vector<8x64xf32>
    %89 = arith.addf %87, %88 : vector<8x64xf32>
    %90 = arith.negf %89 : vector<8x64xf32>
    %91 = math.exp %90 : vector<8x64xf32>
    %cst_30 = arith.constant 1.000000e+00 : f32
    %92 = vector.broadcast %cst_30 : f32 to vector<8x64xf32>
    %93 = arith.addf %92, %91 : vector<8x64xf32>
    %94 = arith.divf %92, %93 : vector<8x64xf32>
    %95 = vector.extract_strided_slice %94 {offsets = [0, 0], sizes = [8, 32], strides = [1, 1]} : vector<8x64xf32> to vector<8x32xf32>
    %96 = vector.extract_strided_slice %94 {offsets = [0, 32], sizes = [8, 32], strides = [1, 1]} : vector<8x64xf32> to vector<8x32xf32>
    %97 = vector.extract_strided_slice %85 {offsets = [0, 64], sizes = [8, 32], strides = [1, 1]} : vector<8x96xf32> to vector<8x32xf32>
    %98 = vector.extract_strided_slice %86 {offsets = [0, 64], sizes = [8, 32], strides = [1, 1]} : vector<8x96xf32> to vector<8x32xf32>
    %99 = arith.addf %98, %15 : vector<8x32xf32>
    %100 = arith.mulf %95, %99 : vector<8x32xf32>
    %101 = arith.addf %97, %100 : vector<8x32xf32>
    %102 = math.tanh %101 : vector<8x32xf32>
    %cst_31 = arith.constant 1.000000e+00 : f32
    %103 = vector.broadcast %cst_31 : f32 to vector<8x32xf32>
    %104 = arith.subf %103, %96 : vector<8x32xf32>
    %105 = arith.mulf %104, %102 : vector<8x32xf32>
    %106 = arith.mulf %96, %81 : vector<8x32xf32>
    %107 = arith.addf %105, %106 : vector<8x32xf32>
    %108 = arith.addi %16, %c2_i32 : i32
    %109 = vector.broadcast %108 : i32 to vector<8x1xi32>
    %110 = arith.cmpi slt, %109, %11 : vector<8x1xi32>
    %111 = vector.shape_cast %110 : vector<8x1xi1> to vector<8x1xi1>
    %112 = vector.broadcast %111 : vector<8x1xi1> to vector<8x32xi1>
    %113 = arith.select %112, %107, %81 : vector<8x32xi1>, vector<8x32xf32>
    %c3_i32 = arith.constant 3 : i32
    %c8_i32_32 = arith.constant 8 : i32
    %114 = arith.muli %c3_i32, %c8_i32_32 : i32
    %115 = tpu.assume_multiple %114, 8 : i32
    %116 = arith.index_cast %115 : i32 to index
    %c0_33 = arith.constant 0 : index
    %117 = vector.load %arg11[%116, %c0_33] : memref<64x96xf32, #tpu.memory_space<vmem>>, vector<8x96xf32>
    %cst_34 = arith.constant dense<0.000000e+00> : vector<8x96xf32>
    %118 = tpu.matmul %113, %12, %cst_34 {dimension_numbers = #tpu.dot_dimension_numbers<[1], [0], [0], [1], [0, 0, 1, 1], [], []>} : vector<8x32xf32>, vector<32x96xf32>, vector<8x96xf32> -> vector<8x96xf32>
    %119 = vector.extract_strided_slice %117 {offsets = [0, 0], sizes = [8, 64], strides = [1, 1]} : vector<8x96xf32> to vector<8x64xf32>
    %120 = vector.extract_strided_slice %118 {offsets = [0, 0], sizes = [8, 64], strides = [1, 1]} : vector<8x96xf32> to vector<8x64xf32>
    %121 = arith.addf %119, %120 : vector<8x64xf32>
    %122 = arith.negf %121 : vector<8x64xf32>
    %123 = math.exp %122 : vector<8x64xf32>
    %cst_35 = arith.constant 1.000000e+00 : f32
    %124 = vector.broadcast %cst_35 : f32 to vector<8x64xf32>
    %125 = arith.addf %124, %123 : vector<8x64xf32>
    %126 = arith.divf %124, %125 : vector<8x64xf32>
    %127 = vector.extract_strided_slice %126 {offsets = [0, 0], sizes = [8, 32], strides = [1, 1]} : vector<8x64xf32> to vector<8x32xf32>
    %128 = vector.extract_strided_slice %126 {offsets = [0, 32], sizes = [8, 32], strides = [1, 1]} : vector<8x64xf32> to vector<8x32xf32>
    %129 = vector.extract_strided_slice %117 {offsets = [0, 64], sizes = [8, 32], strides = [1, 1]} : vector<8x96xf32> to vector<8x32xf32>
    %130 = vector.extract_strided_slice %118 {offsets = [0, 64], sizes = [8, 32], strides = [1, 1]} : vector<8x96xf32> to vector<8x32xf32>
    %131 = arith.addf %130, %15 : vector<8x32xf32>
    %132 = arith.mulf %127, %131 : vector<8x32xf32>
    %133 = arith.addf %129, %132 : vector<8x32xf32>
    %134 = math.tanh %133 : vector<8x32xf32>
    %cst_36 = arith.constant 1.000000e+00 : f32
    %135 = vector.broadcast %cst_36 : f32 to vector<8x32xf32>
    %136 = arith.subf %135, %128 : vector<8x32xf32>
    %137 = arith.mulf %136, %134 : vector<8x32xf32>
    %138 = arith.mulf %128, %113 : vector<8x32xf32>
    %139 = arith.addf %137, %138 : vector<8x32xf32>
    %140 = arith.addi %16, %c3_i32 : i32
    %141 = vector.broadcast %140 : i32 to vector<8x1xi32>
    %142 = arith.cmpi slt, %141, %11 : vector<8x1xi32>
    %143 = vector.shape_cast %142 : vector<8x1xi1> to vector<8x1xi1>
    %144 = vector.broadcast %143 : vector<8x1xi1> to vector<8x32xi1>
    %145 = arith.select %144, %139, %113 : vector<8x32xi1>, vector<8x32xf32>
    %c4_i32 = arith.constant 4 : i32
    %c8_i32_37 = arith.constant 8 : i32
    %146 = arith.muli %c4_i32, %c8_i32_37 : i32
    %147 = tpu.assume_multiple %146, 8 : i32
    %148 = arith.index_cast %147 : i32 to index
    %c0_38 = arith.constant 0 : index
    %149 = vector.load %arg11[%148, %c0_38] : memref<64x96xf32, #tpu.memory_space<vmem>>, vector<8x96xf32>
    %cst_39 = arith.constant dense<0.000000e+00> : vector<8x96xf32>
    %150 = tpu.matmul %145, %12, %cst_39 {dimension_numbers = #tpu.dot_dimension_numbers<[1], [0], [0], [1], [0, 0, 1, 1], [], []>} : vector<8x32xf32>, vector<32x96xf32>, vector<8x96xf32> -> vector<8x96xf32>
    %151 = vector.extract_strided_slice %149 {offsets = [0, 0], sizes = [8, 64], strides = [1, 1]} : vector<8x96xf32> to vector<8x64xf32>
    %152 = vector.extract_strided_slice %150 {offsets = [0, 0], sizes = [8, 64], strides = [1, 1]} : vector<8x96xf32> to vector<8x64xf32>
    %153 = arith.addf %151, %152 : vector<8x64xf32>
    %154 = arith.negf %153 : vector<8x64xf32>
    %155 = math.exp %154 : vector<8x64xf32>
    %cst_40 = arith.constant 1.000000e+00 : f32
    %156 = vector.broadcast %cst_40 : f32 to vector<8x64xf32>
    %157 = arith.addf %156, %155 : vector<8x64xf32>
    %158 = arith.divf %156, %157 : vector<8x64xf32>
    %159 = vector.extract_strided_slice %158 {offsets = [0, 0], sizes = [8, 32], strides = [1, 1]} : vector<8x64xf32> to vector<8x32xf32>
    %160 = vector.extract_strided_slice %158 {offsets = [0, 32], sizes = [8, 32], strides = [1, 1]} : vector<8x64xf32> to vector<8x32xf32>
    %161 = vector.extract_strided_slice %149 {offsets = [0, 64], sizes = [8, 32], strides = [1, 1]} : vector<8x96xf32> to vector<8x32xf32>
    %162 = vector.extract_strided_slice %150 {offsets = [0, 64], sizes = [8, 32], strides = [1, 1]} : vector<8x96xf32> to vector<8x32xf32>
    %163 = arith.addf %162, %15 : vector<8x32xf32>
    %164 = arith.mulf %159, %163 : vector<8x32xf32>
    %165 = arith.addf %161, %164 : vector<8x32xf32>
    %166 = math.tanh %165 : vector<8x32xf32>
    %cst_41 = arith.constant 1.000000e+00 : f32
    %167 = vector.broadcast %cst_41 : f32 to vector<8x32xf32>
    %168 = arith.subf %167, %160 : vector<8x32xf32>
    %169 = arith.mulf %168, %166 : vector<8x32xf32>
    %170 = arith.mulf %160, %145 : vector<8x32xf32>
    %171 = arith.addf %169, %170 : vector<8x32xf32>
    %172 = arith.addi %16, %c4_i32 : i32
    %173 = vector.broadcast %172 : i32 to vector<8x1xi32>
    %174 = arith.cmpi slt, %173, %11 : vector<8x1xi32>
    %175 = vector.shape_cast %174 : vector<8x1xi1> to vector<8x1xi1>
    %176 = vector.broadcast %175 : vector<8x1xi1> to vector<8x32xi1>
    %177 = arith.select %176, %171, %145 : vector<8x32xi1>, vector<8x32xf32>
    %c5_i32 = arith.constant 5 : i32
    %c8_i32_42 = arith.constant 8 : i32
    %178 = arith.muli %c5_i32, %c8_i32_42 : i32
    %179 = tpu.assume_multiple %178, 8 : i32
    %180 = arith.index_cast %179 : i32 to index
    %c0_43 = arith.constant 0 : index
    %181 = vector.load %arg11[%180, %c0_43] : memref<64x96xf32, #tpu.memory_space<vmem>>, vector<8x96xf32>
    %cst_44 = arith.constant dense<0.000000e+00> : vector<8x96xf32>
    %182 = tpu.matmul %177, %12, %cst_44 {dimension_numbers = #tpu.dot_dimension_numbers<[1], [0], [0], [1], [0, 0, 1, 1], [], []>} : vector<8x32xf32>, vector<32x96xf32>, vector<8x96xf32> -> vector<8x96xf32>
    %183 = vector.extract_strided_slice %181 {offsets = [0, 0], sizes = [8, 64], strides = [1, 1]} : vector<8x96xf32> to vector<8x64xf32>
    %184 = vector.extract_strided_slice %182 {offsets = [0, 0], sizes = [8, 64], strides = [1, 1]} : vector<8x96xf32> to vector<8x64xf32>
    %185 = arith.addf %183, %184 : vector<8x64xf32>
    %186 = arith.negf %185 : vector<8x64xf32>
    %187 = math.exp %186 : vector<8x64xf32>
    %cst_45 = arith.constant 1.000000e+00 : f32
    %188 = vector.broadcast %cst_45 : f32 to vector<8x64xf32>
    %189 = arith.addf %188, %187 : vector<8x64xf32>
    %190 = arith.divf %188, %189 : vector<8x64xf32>
    %191 = vector.extract_strided_slice %190 {offsets = [0, 0], sizes = [8, 32], strides = [1, 1]} : vector<8x64xf32> to vector<8x32xf32>
    %192 = vector.extract_strided_slice %190 {offsets = [0, 32], sizes = [8, 32], strides = [1, 1]} : vector<8x64xf32> to vector<8x32xf32>
    %193 = vector.extract_strided_slice %181 {offsets = [0, 64], sizes = [8, 32], strides = [1, 1]} : vector<8x96xf32> to vector<8x32xf32>
    %194 = vector.extract_strided_slice %182 {offsets = [0, 64], sizes = [8, 32], strides = [1, 1]} : vector<8x96xf32> to vector<8x32xf32>
    %195 = arith.addf %194, %15 : vector<8x32xf32>
    %196 = arith.mulf %191, %195 : vector<8x32xf32>
    %197 = arith.addf %193, %196 : vector<8x32xf32>
    %198 = math.tanh %197 : vector<8x32xf32>
    %cst_46 = arith.constant 1.000000e+00 : f32
    %199 = vector.broadcast %cst_46 : f32 to vector<8x32xf32>
    %200 = arith.subf %199, %192 : vector<8x32xf32>
    %201 = arith.mulf %200, %198 : vector<8x32xf32>
    %202 = arith.mulf %192, %177 : vector<8x32xf32>
    %203 = arith.addf %201, %202 : vector<8x32xf32>
    %204 = arith.addi %16, %c5_i32 : i32
    %205 = vector.broadcast %204 : i32 to vector<8x1xi32>
    %206 = arith.cmpi slt, %205, %11 : vector<8x1xi32>
    %207 = vector.shape_cast %206 : vector<8x1xi1> to vector<8x1xi1>
    %208 = vector.broadcast %207 : vector<8x1xi1> to vector<8x32xi1>
    %209 = arith.select %208, %203, %177 : vector<8x32xi1>, vector<8x32xf32>
    %c6_i32 = arith.constant 6 : i32
    %c8_i32_47 = arith.constant 8 : i32
    %210 = arith.muli %c6_i32, %c8_i32_47 : i32
    %211 = tpu.assume_multiple %210, 8 : i32
    %212 = arith.index_cast %211 : i32 to index
    %c0_48 = arith.constant 0 : index
    %213 = vector.load %arg11[%212, %c0_48] : memref<64x96xf32, #tpu.memory_space<vmem>>, vector<8x96xf32>
    %cst_49 = arith.constant dense<0.000000e+00> : vector<8x96xf32>
    %214 = tpu.matmul %209, %12, %cst_49 {dimension_numbers = #tpu.dot_dimension_numbers<[1], [0], [0], [1], [0, 0, 1, 1], [], []>} : vector<8x32xf32>, vector<32x96xf32>, vector<8x96xf32> -> vector<8x96xf32>
    %215 = vector.extract_strided_slice %213 {offsets = [0, 0], sizes = [8, 64], strides = [1, 1]} : vector<8x96xf32> to vector<8x64xf32>
    %216 = vector.extract_strided_slice %214 {offsets = [0, 0], sizes = [8, 64], strides = [1, 1]} : vector<8x96xf32> to vector<8x64xf32>
    %217 = arith.addf %215, %216 : vector<8x64xf32>
    %218 = arith.negf %217 : vector<8x64xf32>
    %219 = math.exp %218 : vector<8x64xf32>
    %cst_50 = arith.constant 1.000000e+00 : f32
    %220 = vector.broadcast %cst_50 : f32 to vector<8x64xf32>
    %221 = arith.addf %220, %219 : vector<8x64xf32>
    %222 = arith.divf %220, %221 : vector<8x64xf32>
    %223 = vector.extract_strided_slice %222 {offsets = [0, 0], sizes = [8, 32], strides = [1, 1]} : vector<8x64xf32> to vector<8x32xf32>
    %224 = vector.extract_strided_slice %222 {offsets = [0, 32], sizes = [8, 32], strides = [1, 1]} : vector<8x64xf32> to vector<8x32xf32>
    %225 = vector.extract_strided_slice %213 {offsets = [0, 64], sizes = [8, 32], strides = [1, 1]} : vector<8x96xf32> to vector<8x32xf32>
    %226 = vector.extract_strided_slice %214 {offsets = [0, 64], sizes = [8, 32], strides = [1, 1]} : vector<8x96xf32> to vector<8x32xf32>
    %227 = arith.addf %226, %15 : vector<8x32xf32>
    %228 = arith.mulf %223, %227 : vector<8x32xf32>
    %229 = arith.addf %225, %228 : vector<8x32xf32>
    %230 = math.tanh %229 : vector<8x32xf32>
    %cst_51 = arith.constant 1.000000e+00 : f32
    %231 = vector.broadcast %cst_51 : f32 to vector<8x32xf32>
    %232 = arith.subf %231, %224 : vector<8x32xf32>
    %233 = arith.mulf %232, %230 : vector<8x32xf32>
    %234 = arith.mulf %224, %209 : vector<8x32xf32>
    %235 = arith.addf %233, %234 : vector<8x32xf32>
    %236 = arith.addi %16, %c6_i32 : i32
    %237 = vector.broadcast %236 : i32 to vector<8x1xi32>
    %238 = arith.cmpi slt, %237, %11 : vector<8x1xi32>
    %239 = vector.shape_cast %238 : vector<8x1xi1> to vector<8x1xi1>
    %240 = vector.broadcast %239 : vector<8x1xi1> to vector<8x32xi1>
    %241 = arith.select %240, %235, %209 : vector<8x32xi1>, vector<8x32xf32>
    %c7_i32 = arith.constant 7 : i32
    %c8_i32_52 = arith.constant 8 : i32
    %242 = arith.muli %c7_i32, %c8_i32_52 : i32
    %243 = tpu.assume_multiple %242, 8 : i32
    %244 = arith.index_cast %243 : i32 to index
    %c0_53 = arith.constant 0 : index
    %245 = vector.load %arg11[%244, %c0_53] : memref<64x96xf32, #tpu.memory_space<vmem>>, vector<8x96xf32>
    %cst_54 = arith.constant dense<0.000000e+00> : vector<8x96xf32>
    %246 = tpu.matmul %241, %12, %cst_54 {dimension_numbers = #tpu.dot_dimension_numbers<[1], [0], [0], [1], [0, 0, 1, 1], [], []>} : vector<8x32xf32>, vector<32x96xf32>, vector<8x96xf32> -> vector<8x96xf32>
    %247 = vector.extract_strided_slice %245 {offsets = [0, 0], sizes = [8, 64], strides = [1, 1]} : vector<8x96xf32> to vector<8x64xf32>
    %248 = vector.extract_strided_slice %246 {offsets = [0, 0], sizes = [8, 64], strides = [1, 1]} : vector<8x96xf32> to vector<8x64xf32>
    %249 = arith.addf %247, %248 : vector<8x64xf32>
    %250 = arith.negf %249 : vector<8x64xf32>
    %251 = math.exp %250 : vector<8x64xf32>
    %cst_55 = arith.constant 1.000000e+00 : f32
    %252 = vector.broadcast %cst_55 : f32 to vector<8x64xf32>
    %253 = arith.addf %252, %251 : vector<8x64xf32>
    %254 = arith.divf %252, %253 : vector<8x64xf32>
    %255 = vector.extract_strided_slice %254 {offsets = [0, 0], sizes = [8, 32], strides = [1, 1]} : vector<8x64xf32> to vector<8x32xf32>
    %256 = vector.extract_strided_slice %254 {offsets = [0, 32], sizes = [8, 32], strides = [1, 1]} : vector<8x64xf32> to vector<8x32xf32>
    %257 = vector.extract_strided_slice %245 {offsets = [0, 64], sizes = [8, 32], strides = [1, 1]} : vector<8x96xf32> to vector<8x32xf32>
    %258 = vector.extract_strided_slice %246 {offsets = [0, 64], sizes = [8, 32], strides = [1, 1]} : vector<8x96xf32> to vector<8x32xf32>
    %259 = arith.addf %258, %15 : vector<8x32xf32>
    %260 = arith.mulf %255, %259 : vector<8x32xf32>
    %261 = arith.addf %257, %260 : vector<8x32xf32>
    %262 = math.tanh %261 : vector<8x32xf32>
    %cst_56 = arith.constant 1.000000e+00 : f32
    %263 = vector.broadcast %cst_56 : f32 to vector<8x32xf32>
    %264 = arith.subf %263, %256 : vector<8x32xf32>
    %265 = arith.mulf %264, %262 : vector<8x32xf32>
    %266 = arith.mulf %256, %241 : vector<8x32xf32>
    %267 = arith.addf %265, %266 : vector<8x32xf32>
    %268 = arith.addi %16, %c7_i32 : i32
    %269 = vector.broadcast %268 : i32 to vector<8x1xi32>
    %270 = arith.cmpi slt, %269, %11 : vector<8x1xi32>
    %271 = vector.shape_cast %270 : vector<8x1xi1> to vector<8x1xi1>
    %272 = vector.broadcast %271 : vector<8x1xi1> to vector<8x32xi1>
    %273 = arith.select %272, %267, %241 : vector<8x32xi1>, vector<8x32xf32>
    %c8_i32_57 = arith.constant 8 : i32
    %c0_58 = arith.constant 0 : index
    %c0_59 = arith.constant 0 : index
    %274 = vector.load %arg10[%c0_58, %c0_59] : memref<8x32xf32, #tpu.memory_space<vmem>>, vector<8x32xf32>
    tpu.vector_store %arg10[%c0_58, %c0_59], %273 {strides = array<i32>} : memref<8x32xf32, #tpu.memory_space<vmem>>, vector<8x32xf32>,
    %c0_i32_60 = arith.constant 0 : i32
    %275 = arith.cmpi eq, %arg0, %c0_i32_60 : i32
    %276 = arith.extui %275 : i1 to i32
    %c0_i32_61 = arith.constant 0 : i32
    %277 = arith.cmpi ne, %276, %c0_i32_61 : i32
    scf.if %277 {
      %c0_62 = arith.constant 0 : index
      %c0_63 = arith.constant 0 : index
      %278 = vector.load %arg10[%c0_62, %c0_63] : memref<8x32xf32, #tpu.memory_space<vmem>>, vector<8x32xf32>
      %c0_64 = arith.constant 0 : index
      %c0_65 = arith.constant 0 : index
      %279 = vector.load %arg9[%c0_64, %c0_65] : memref<8x64xf32, #tpu.memory_space<vmem>>, vector<8x32xf32>
      tpu.vector_store %arg9[%c0_64, %c0_65], %278 {strides = array<i32>} : memref<8x64xf32, #tpu.memory_space<vmem>>, vector<8x32xf32>,
      %c0_66 = arith.constant 0 : index
      %c0_67 = arith.constant 0 : index
      %280 = vector.load %arg7[%c0_66, %c0_67] : memref<8x96xf32, #tpu.memory_space<vmem>>, vector<8x96xf32>
      %281 = vector.extract_strided_slice %280 {offsets = [0, 0], sizes = [8, 64], strides = [1, 1]} : vector<8x96xf32> to vector<8x64xf32>
      %282 = arith.negf %281 : vector<8x64xf32>
      %283 = math.exp %282 : vector<8x64xf32>
      %cst_68 = arith.constant 1.000000e+00 : f32
      %284 = vector.broadcast %cst_68 : f32 to vector<8x64xf32>
      %285 = arith.addf %284, %283 : vector<8x64xf32>
      %286 = arith.divf %284, %285 : vector<8x64xf32>
      %287 = vector.extract_strided_slice %286 {offsets = [0, 0], sizes = [8, 32], strides = [1, 1]} : vector<8x64xf32> to vector<8x32xf32>
      %288 = vector.extract_strided_slice %286 {offsets = [0, 32], sizes = [8, 32], strides = [1, 1]} : vector<8x64xf32> to vector<8x32xf32>
      %289 = vector.extract_strided_slice %280 {offsets = [0, 64], sizes = [8, 32], strides = [1, 1]} : vector<8x96xf32> to vector<8x32xf32>
      %c0_69 = arith.constant 0 : index
      %c0_70 = arith.constant 0 : index
      %290 = vector.load %arg8[%c0_69, %c0_70] : memref<1x32xf32, #tpu.memory_space<vmem>>, vector<1x32xf32>
      %291 = vector.shape_cast %290 : vector<1x32xf32> to vector<1x32xf32>
      %292 = vector.broadcast %291 : vector<1x32xf32> to vector<8x32xf32>
      %293 = arith.mulf %287, %292 : vector<8x32xf32>
      %294 = arith.addf %289, %293 : vector<8x32xf32>
      %295 = math.tanh %294 : vector<8x32xf32>
      %cst_71 = arith.constant 1.000000e+00 : f32
      %296 = vector.broadcast %cst_71 : f32 to vector<8x32xf32>
      %297 = arith.subf %296, %288 : vector<8x32xf32>
      %298 = arith.mulf %297, %295 : vector<8x32xf32>
      %c0_72 = arith.constant 0 : index
      %c32 = arith.constant 32 : index
      %299 = vector.load %arg9[%c0_72, %c32] : memref<8x64xf32, #tpu.memory_space<vmem>>, vector<8x32xf32>
      tpu.vector_store %arg9[%c0_72, %c32], %298 {strides = array<i32>} : memref<8x64xf32, #tpu.memory_space<vmem>>, vector<8x32xf32>,
    } else {
    }
    return
  }
  func.func @transform_0(%arg0: i32) -> (i32, i32) {
    %c0_i32 = arith.constant 0 : i32
    %c0_i32_0 = arith.constant 0 : i32
    %c0_i32_1 = arith.constant 0 : i32
    return %c0_i32, %c0_i32_0 : i32, i32
  }
  func.func @transform_1(%arg0: i32) -> (i32, i32) {
    %c0_i32 = arith.constant 0 : i32
    %c0_i32_0 = arith.constant 0 : i32
    return %arg0, %c0_i32 : i32, i32
  }
  func.func @transform_2(%arg0: i32) -> (i32, i32) {
    %c0_i32 = arith.constant 0 : i32
    %c0_i32_0 = arith.constant 0 : i32
    %c0_i32_1 = arith.constant 0 : i32
    return %c0_i32, %c0_i32_0 : i32, i32
  }
  func.func @transform_3(%arg0: i32) -> (i32, i32) {
    %c0_i32 = arith.constant 0 : i32
    %c0_i32_0 = arith.constant 0 : i32
    %c0_i32_1 = arith.constant 0 : i32
    return %c0_i32, %c0_i32_0 : i32, i32
  }
  func.func @transform_4(%arg0: i32) -> (i32, i32) {
    %c0_i32 = arith.constant 0 : i32
    %c0_i32_0 = arith.constant 0 : i32
    %c0_i32_1 = arith.constant 0 : i32
    return %c0_i32, %c0_i32_0 : i32, i32
  }
  func.func @transform_5(%arg0: i32) -> (i32, i32) {
    %c0_i32 = arith.constant 0 : i32
    %c0_i32_0 = arith.constant 0 : i32
    %c0_i32_1 = arith.constant 0 : i32
    return %c0_i32, %c0_i32_0 : i32, i32
  }
  func.func @transform_6(%arg0: i32) -> (i32, i32) {
    %c0_i32 = arith.constant 0 : i32
    %c0_i32_0 = arith.constant 0 : i32
    %c0_i32_1 = arith.constant 0 : i32
    return %c0_i32, %c0_i32_0 : i32, i32
  }
  func.func @transform_7(%arg0: i32) -> (i32, i32) {
    %c0_i32 = arith.constant 0 : i32
    %c0_i32_0 = arith.constant 0 : i32
    %c0_i32_1 = arith.constant 0 : i32
    return %c0_i32, %c0_i32_0 : i32, i32
  }
  func.func @transform_8(%arg0: i32) -> (i32, i32) {
    %c0_i32 = arith.constant 0 : i32
    %c0_i32_0 = arith.constant 0 : i32
    %c0_i32_1 = arith.constant 0 : i32
    return %c0_i32, %c0_i32_0 : i32, i32
  }
}

</mosaic_0001>

<llo_original>
// kernel: tpu_custom_call.1
$region0: #{tpu_custom_call.1}
  #allocation0 [shape = 'u32[]', space=smem, size = 0x4, offset = 0x4, fixed_abs, tag = 'smem constant byte address 0x4 - core index']
  #allocation1 [shape = 'u32[144,128]{1,0:T(1,128)}', space=vmem, size = 0x12000, scoped, tag = 'internal scratch']
  #allocation2 [shape = 'f32[8,32]{1,0:T(8,128)}', space=vmem, size = 0x1000, scoped, tag = 'scratch operand']
  #allocation3 [shape = 'f32[64,96]{1,0:T(8,128)}', space=vmem, size = 0x8000, scoped, tag = 'scratch operand']
  %s0 = inlined_call_operand.vmem [shape: s32[8,1], index: 0, kind: input, shape index: {}]
  %s1 = inlined_call_operand.vmem [shape: f32[64,32], index: 1, kind: input, shape index: {}]
  %s2 = inlined_call_operand.vmem [shape: f32[32,96], index: 2, kind: input, shape index: {}]
  %s3 = inlined_call_operand.vmem [shape: f32[1,96], index: 3, kind: input, shape index: {}]
  %s4 = inlined_call_operand.vmem [shape: f32[32,96], index: 4, kind: input, shape index: {}]
  %s5 = inlined_call_operand.vmem [shape: f32[1,32], index: 5, kind: input, shape index: {}]
  %s6 = inlined_call_operand.vmem [shape: f32[8,96], index: 6, kind: input, shape index: {}]
  %s7 = inlined_call_operand.vmem [shape: f32[1,32], index: 7, kind: input, shape index: {}]
  %s8 = inlined_call_operand.hbm [shape: f32[8,64], index: 8, kind: output, shape index: {}]
  %s9 = sld [smem:[#allocation0]]
  $region50: #{tpu_custom_call.1} parent=0
    _
  %s11 = ssub.s32 1, %s9
  %s12 = scalar_select 0, %s11, %s9
  $region1: #{tpu_custom_call.1} parent=0
    #allocation4 [shape = 'u8[4096]{0}', space=vmem, size = 0x1000, scoped, tag = 'output window, operand 0, single buffered']
    #allocation5 [shape = 's32[1]{0}', space=sflag, size = 0x4, scoped, tag = 'scoped memory for tpu_custom_call.1']
    %13 = vsyncpa [#allocation5], 0
    // Predicated region
    $region2: #{tpu_custom_call.1} parent=1 // pred_check
      _
    $region3: #{tpu_custom_call.1} parent=1 // pred_check_branch
      %15 = sbr.rel (0) target = $region5
    $region4: #{tpu_custom_call.1} parent=1 // pred_region
      _
    $region5: #{tpu_custom_call.1} parent=1 // pred_fallthru
      _
    // Predicated region
    $region6: #{tpu_custom_call.1} parent=1 // pred_check
      _
    $region7: #{tpu_custom_call.1} parent=1 // pred_check_branch
      %17 = sbr.rel (0) target = $region9
    $region8: #{tpu_custom_call.1} parent=1 // pred_region
      _
    $region9: #{tpu_custom_call.1} parent=1 // pred_fallthru
      _
    // Predicated region
    $region10: #{tpu_custom_call.1} parent=1 // pred_check
      _
    $region11: #{tpu_custom_call.1} parent=1 // pred_check_branch
      %19 = sbr.rel (0) target = $region13
    $region12: #{tpu_custom_call.1} parent=1 // pred_region
      _
    $region13: #{tpu_custom_call.1} parent=1 // pred_fallthru
      _
    // Predicated region
    $region14: #{tpu_custom_call.1} parent=1 // pred_check
      _
    $region15: #{tpu_custom_call.1} parent=1 // pred_check_branch
      %21 = sbr.rel (0) target = $region17
    $region16: #{tpu_custom_call.1} parent=1 // pred_region
      _
    $region17: #{tpu_custom_call.1} parent=1 // pred_fallthru
      _
    // Predicated region
    $region18: #{tpu_custom_call.1} parent=1 // pred_check
      _
    $region19: #{tpu_custom_call.1} parent=1 // pred_check_branch
      %23 = sbr.rel (0) target = $region21
    $region20: #{tpu_custom_call.1} parent=1 // pred_region
      _
    $region21: #{tpu_custom_call.1} parent=1 // pred_fallthru
      _
    // Predicated region
    $region22: #{tpu_custom_call.1} parent=1 // pred_check
      _
    $region23: #{tpu_custom_call.1} parent=1 // pred_check_branch
      %25 = sbr.rel (0) target = $region25
    $region24: #{tpu_custom_call.1} parent=1 // pred_region
      _
    $region25: #{tpu_custom_call.1} parent=1 // pred_fallthru
      _
    // Predicated region
    $region26: #{tpu_custom_call.1} parent=1 // pred_check
      _
    $region27: #{tpu_custom_call.1} parent=1 // pred_check_branch
      %27 = sbr.rel (0) target = $region29
    $region28: #{tpu_custom_call.1} parent=1 // pred_region
      _
    $region29: #{tpu_custom_call.1} parent=1 // pred_fallthru
      _
    // Predicated region
    $region30: #{tpu_custom_call.1} parent=1 // pred_check
      _
    $region31: #{tpu_custom_call.1} parent=1 // pred_check_branch
      %29 = sbr.rel (0) target = $region33
    $region32: #{tpu_custom_call.1} parent=1 // pred_region
      _
    $region33: #{tpu_custom_call.1} parent=1 // pred_fallthru
      _
    %p30 = scmp.eq.s32.totalorder 0, 0
    // Predicated region
    $region34: #{tpu_custom_call.1} parent=1 // pred_check
      %p31 = pneg %p30
    $region35: #{tpu_custom_call.1} parent=1 // pred_check_branch
      %33 = sbr.rel (%p31) target = $region37
    $region36: #{tpu_custom_call.1} parent=1 // pred_region
      %vm34 = vcmask 261120
      %35 = vst.msk [vmem:[#allocation2] sm:$0xff] %vm34, 0.0
    $region37: #{tpu_custom_call.1} parent=1 // pred_fallthru
      _
    %v36 = vld [vmem:[%s1] sm:$0xff]
    %v37 = vld [vmem:[%s1 + $0x8] sm:$0xff]
    %v38 = vld [vmem:[%s1 + $0x10] sm:$0xff]
    %v39 = vld [vmem:[%s1 + $0x18] sm:$0xff]
    %v40 = vld [vmem:[%s1 + $0x20] sm:$0xff]
    %v41 = vld [vmem:[%s1 + $0x28] sm:$0xff]
    %v42 = vld [vmem:[%s1 + $0x30] sm:$0xff]
    %v43 = vld [vmem:[%s1 + $0x38] sm:$0xff]
    %v44 = vld [vmem:[%s2] sm:$0xff]
    %v45 = vld [vmem:[%s2 + $0x8] sm:$0xff]
    %v46 = vld [vmem:[%s2 + $0x10] sm:$0xff]
    %v47 = vld [vmem:[%s2 + $0x18] sm:$0xff]
    %v48 = vld [vmem:[%s3] sm:$0x1]
    %v50 = vlaneseq
    %v51 = vshrl.u32 %v50, 7
    %v52 = vsub.s32 0, %v51
    %v53 = vrot.slane %v48, %v52
    %vm55 = vcmask 261120
    %v57 = vsel %vm55, %v36, 0
    %v60 = vsel %vm55, %v37, 0
    %v63 = vsel %vm55, %v38, 0
    %v66 = vsel %vm55, %v39, 0
    %v69 = vsel %vm55, %v40, 0
    %v72 = vsel %vm55, %v41, 0
    %v75 = vsel %vm55, %v42, 0
    %v78 = vsel %vm55, %v43, 0
    %80 = vmatprep.subr.mxu0 0.0
    %81 = vmatpush1.msra.mxu0 %v44
    %82 = vmatprep.subr.mxu0 0.0
    %83 = vmatpush1.msra.mxu0 %v45
    %84 = vmatprep.subr.mxu0 0.0
    %85 = vmatpush1.msra.mxu0 %v46
    %86 = vmatprep.subr.mxu0 0.0
    %87 = vmatpush1.msra.mxu0 %v47
    %88 = vmatprep.subr.mxu0 0.0
    %89 = vmatpush1.msra.mxu0 0.0
    %90 = vmatprep.subr.mxu0 0.0
    %91 = vmatpush1.msra.mxu0 0.0
    %92 = vmatprep.subr.mxu0 0.0
    %93 = vmatpush1.msra.mxu0 0.0
    %94 = vmatprep.subr.mxu0 0.0
    %95 = vmatpush1.msra.mxu0 0.0
    %96 = vmatprep.subr.mxu0 0.0
    %97 = vmatpush1.msra.mxu0 0.0
    %98 = vmatprep.subr.mxu0 0.0
    %99 = vmatpush1.msra.mxu0 0.0
    %100 = vmatprep.subr.mxu0 0.0
    %101 = vmatpush1.msra.mxu0 0.0
    %102 = vmatprep.subr.mxu0 0.0
    %103 = vmatpush1.msra.mxu0 0.0
    %104 = vmatprep.subr.mxu0 0.0
    %105 = vmatpush1.msra.mxu0 0.0
    %106 = vmatprep.subr.mxu0 0.0
    %107 = vmatpush1.msra.mxu0 0.0
    %108 = vmatprep.subr.mxu0 0.0
    %109 = vmatpush1.msra.mxu0 0.0
    %110 = vmatprep.subr.mxu0 0.0
    %111 = vmatpush1.msra.mxu0 0.0
    %112 = vmatprep.subr.mxu0 0.0
    %113 = vmatpush1.msra.mxu0 0.0
    %114 = vmatprep.subr.mxu0 0.0
    %115 = vmatpush1.msra.mxu0 0.0
    %116 = vmatprep.subr.mxu0 0.0
    %117 = vmatpush1.msra.mxu0 0.0
    %118 = vmatprep.subr.mxu0 0.0
    %119 = vmatpush1.msra.mxu0 0.0
    %120 = vmatprep.subr.mxu0 0.0
    %121 = vmatpush1.msra.mxu0 0.0
    %122 = vmatprep.subr.mxu0 0.0
    %123 = vmatpush1.msra.mxu0 0.0
    %124 = vmatprep.subr.mxu0 0.0
    %125 = vmatpush1.msra.mxu0 0.0
    %126 = vmatprep.subr.mxu0 0.0
    %127 = vmatpush1.msra.mxu0 0.0
    %128 = vmatprep.subr.mxu0 0.0
    %129 = vmatpush1.msra.mxu0 0.0
    %130 = vmatprep.subr.mxu0 0.0
    %131 = vmatpush1.msra.mxu0 0.0
    %132 = vmatprep.subr.mxu0 0.0
    %133 = vmatpush1.msra.mxu0 0.0
    %134 = vmatprep.subr.mxu0 0.0
    %135 = vmatpush1.msra.mxu0 0.0
    %136 = vmatprep.subr.mxu0 0.0
    %137 = vmatpush1.msra.mxu0 0.0
    %138 = vmatprep.subr.mxu0 0.0
    %139 = vmatpush1.msra.mxu0 0.0
    %140 = vmatprep.subr.mxu0 0.0
    %141 = vmatpush1.msra.mxu0 0.0
    %142 = vmatprep.subr.mxu0 0.0
    %143 = vmatpush1.msra.mxu0 0.0
    %144 = vmatprep.mubr.f32.mxu0 0.0
    %145 = vmatmul.mubr.f32.gmra.mrb[0].mxu0 %v57
    %v146 = vpop.f32.mrb[0].mxu0
    %v147 = vadd.f32 %v53, %v146
    %v148 = vpop.f32.mrb[0].mxu0
    %149 = vmatprep.mubr.f32.mxu0 0.0
    %150 = vmatmul.mubr.f32.gmra.mrb[0].mxu0 %v60
    %v151 = vpop.f32.mrb[0].mxu0
    %v152 = vadd.f32 %v53, %v151
    %v153 = vpop.f32.mrb[0].mxu0
    %154 = vmatprep.mubr.f32.mxu0 0.0
    %155 = vmatmul.mubr.f32.gmra.mrb[0].mxu0 %v63
    %v156 = vpop.f32.mrb[0].mxu0
    %v157 = vadd.f32 %v53, %v156
    %v158 = vpop.f32.mrb[0].mxu0
    %159 = vmatprep.mubr.f32.mxu0 0.0
    %160 = vmatmul.mubr.f32.gmra.mrb[0].mxu0 %v66
    %v161 = vpop.f32.mrb[0].mxu0
    %v162 = vadd.f32 %v53, %v161
    %v163 = vpop.f32.mrb[0].mxu0
    %164 = vmatprep.mubr.f32.mxu0 0.0
    %165 = vmatmul.mubr.f32.gmra.mrb[0].mxu0 %v69
    %v166 = vpop.f32.mrb[0].mxu0
    %v167 = vadd.f32 %v53, %v166
    %v168 = vpop.f32.mrb[0].mxu0
    %169 = vmatprep.mubr.f32.mxu0 0.0
    %170 = vmatmul.mubr.f32.gmra.mrb[0].mxu0 %v72
    %v171 = vpop.f32.mrb[0].mxu0
    %v172 = vadd.f32 %v53, %v171
    %v173 = vpop.f32.mrb[0].mxu0
    %174 = vmatprep.mubr.f32.mxu0 0.0
    %175 = vmatmul.mubr.f32.gmra.mrb[0].mxu0 %v75
    %v176 = vpop.f32.mrb[0].mxu0
    %v177 = vadd.f32 %v53, %v176
    %v178 = vpop.f32.mrb[0].mxu0
    %179 = vmatprep.mubr.f32.mxu0 0.0
    %180 = vmatmul.mubr.f32.gmra.mrb[0].mxu0 %v78
    %v181 = vpop.f32.mrb[0].mxu0
    %v182 = vadd.f32 %v53, %v181
    %v183 = vpop.f32.mrb[0].mxu0
    %184 = vdwg.mxu0
    %vm185 = vcmask 785408
    %186 = vst.msk [vmem:[#allocation3] sm:$0xff] %vm185, %v147
    %187 = vst.msk [vmem:[#allocation3 + $0x8] sm:$0xff] %vm185, %v152
    %188 = vst.msk [vmem:[#allocation3 + $0x10] sm:$0xff] %vm185, %v157
    %189 = vst.msk [vmem:[#allocation3 + $0x18] sm:$0xff] %vm185, %v162
    %190 = vst.msk [vmem:[#allocation3 + $0x20] sm:$0xff] %vm185, %v167
    %191 = vst.msk [vmem:[#allocation3 + $0x28] sm:$0xff] %vm185, %v172
    %192 = vst.msk [vmem:[#allocation3 + $0x30] sm:$0xff] %vm185, %v177
    %193 = vst.msk [vmem:[#allocation3 + $0x38] sm:$0xff] %vm185, %v182
    %v194 = vld [vmem:[%s0] sm:$0xff]
    %v195 = vld [vmem:[%s4] sm:$0xff]
    %v196 = vld [vmem:[%s4 + $0x8] sm:$0xff]
    %v197 = vld [vmem:[%s4 + $0x10] sm:$0xff]
    %v198 = vld [vmem:[%s4 + $0x18] sm:$0xff]
    %v199 = vld [vmem:[%s5] sm:$0x1]
    %v201 = vlaneseq
    %v202 = vshrl.u32 %v201, 7
    %v203 = vsub.s32 0, %v202
    %v204 = vrot.slane %v199, %v203
    %s205 = smul.u32 0, 8
    %v206 = vld [vmem:[#allocation2] sm:$0xff]
    %v207 = vld [vmem:[#allocation3] sm:$0xff]
    %v209 = vsel %vm55, %v206, 0
    %211 = vmatprep.subr.mxu0 0.0
    %212 = vmatpush1.msra.mxu0 %v195
    %213 = vmatprep.subr.mxu0 0.0
    %214 = vmatpush1.msra.mxu0 %v196
    %215 = vmatprep.subr.mxu0 0.0
    %216 = vmatpush1.msra.mxu0 %v197
    %217 = vmatprep.subr.mxu0 0.0
    %218 = vmatpush1.msra.mxu0 %v198
    %219 = vmatprep.subr.mxu0 0.0
    %220 = vmatpush1.msra.mxu0 0.0
    %221 = vmatprep.subr.mxu0 0.0
    %222 = vmatpush1.msra.mxu0 0.0
    %223 = vmatprep.subr.mxu0 0.0
    %224 = vmatpush1.msra.mxu0 0.0
    %225 = vmatprep.subr.mxu0 0.0
    %226 = vmatpush1.msra.mxu0 0.0
    %227 = vmatprep.subr.mxu0 0.0
    %228 = vmatpush1.msra.mxu0 0.0
    %229 = vmatprep.subr.mxu0 0.0
    %230 = vmatpush1.msra.mxu0 0.0
    %231 = vmatprep.subr.mxu0 0.0
    %232 = vmatpush1.msra.mxu0 0.0
    %233 = vmatprep.subr.mxu0 0.0
    %234 = vmatpush1.msra.mxu0 0.0
    %235 = vmatprep.subr.mxu0 0.0
    %236 = vmatpush1.msra.mxu0 0.0
    %237 = vmatprep.subr.mxu0 0.0
    %238 = vmatpush1.msra.mxu0 0.0
    %239 = vmatprep.subr.mxu0 0.0
    %240 = vmatpush1.msra.mxu0 0.0
    %241 = vmatprep.subr.mxu0 0.0
    %242 = vmatpush1.msra.mxu0 0.0
    %243 = vmatprep.subr.mxu0 0.0
    %244 = vmatpush1.msra.mxu0 0.0
    %245 = vmatprep.subr.mxu0 0.0
    %246 = vmatpush1.msra.mxu0 0.0
    %247 = vmatprep.subr.mxu0 0.0
    %248 = vmatpush1.msra.mxu0 0.0
    %249 = vmatprep.subr.mxu0 0.0
    %250 = vmatpush1.msra.mxu0 0.0
    %251 = vmatprep.subr.mxu0 0.0
    %252 = vmatpush1.msra.mxu0 0.0
    %253 = vmatprep.subr.mxu0 0.0
    %254 = vmatpush1.msra.mxu0 0.0
    %255 = vmatprep.subr.mxu0 0.0
    %256 = vmatpush1.msra.mxu0 0.0
    %257 = vmatprep.subr.mxu0 0.0
    %258 = vmatpush1.msra.mxu0 0.0
    %259 = vmatprep.subr.mxu0 0.0
    %260 = vmatpush1.msra.mxu0 0.0
    %261 = vmatprep.subr.mxu0 0.0
    %262 = vmatpush1.msra.mxu0 0.0
    %263 = vmatprep.subr.mxu0 0.0
    %264 = vmatpush1.msra.mxu0 0.0
    %265 = vmatprep.subr.mxu0 0.0
    %266 = vmatpush1.msra.mxu0 0.0
    %267 = vmatprep.subr.mxu0 0.0
    %268 = vmatpush1.msra.mxu0 0.0
    %269 = vmatprep.subr.mxu0 0.0
    %270 = vmatpush1.msra.mxu0 0.0
    %271 = vmatprep.subr.mxu0 0.0
    %272 = vmatpush1.msra.mxu0 0.0
    %273 = vmatprep.subr.mxu0 0.0
    %274 = vmatpush1.msra.mxu0 0.0
    %275 = vmatprep.mubr.f32.mxu0 0.0
    %276 = vmatmul.mubr.f32.gmra.mrb[0].mxu0 %v209
    %v277 = vpop.f32.mrb[0].mxu0
    %v278 = vadd.f32 0.0, %v277
    %v279 = vpop.f32.mrb[0].mxu0
    %280 = vdwg.mxu0
    %v281 = vadd.f32 %v207, %v278
    %v282 = vxor.u32 %v281, 2147483648
    %v283 = vmul.f32 %v282, 1.442695
    %v284 = vpow.pop %v283
    %v285 = vadd.f32 %v284, 1.0
    %v286 = vrcp.pop %v285
    %v287 = vmul.f32 1.0, %v286
    %288 = vrot.lane.b32.xlu0 %v204, 64
    %v289 = vpop.permute.xlu0 %288
    %v291 = vadd.f32 %v278, %v289
    %293 = vrot.lane.b32.xlu0 %v291, 64
    %v294 = vpop.permute.xlu0 %293
    %v296 = vmul.f32 %v287, %v294
    %298 = vrot.lane.b32.xlu0 %v296, 64
    %v299 = vpop.permute.xlu0 %298
    %v301 = vadd.f32 %v207, %v299
    %v302 = vtanh.pop %v301
    %v303 = vsub.f32 1.0, %v287
    %305 = vrot.lane.b32.xlu0 %v302, 96
    %v306 = vpop.permute.xlu0 %305
    %v308 = vmul.f32 %v303, %v306
    %309 = vrot.lane.b32.xlu0 %v206, 32
    %v310 = vpop.permute.xlu0 %309
    %v312 = vmul.f32 %v287, %v310
    %v313 = vadd.f32 %v308, %v312
    %v314 = vstv %s205
    %vm315 = vcmp.lt.s32.totalorder %v314, %v194
    %v316 = vsel %vm315, 1, 0
    %317 = vset.pattern.permute.xlu0 0
    %318 = vperm.xlu0 %317, %v316
    %v319 = vpop.permute.xlu0 %318
    %vm320 = vcmp.eq.s32.totalorder %v319, 1
    %v321 = vsel %vm320, %v313, %v310
    %s322 = scalar_lea.vmem [#allocation3], 8
    %v323 = vld [vmem:[%s322] sm:$0xff]
    %325 = vrot.lane.b32.xlu0 %v321, 96
    %v326 = vpop.permute.xlu0 %325
    %v327 = vsel %vm55, %v326, 0
    %329 = vmatprep.subr.mxu0 0.0
    %330 = vmatpush1.msra.mxu0 %v195
    %331 = vmatprep.subr.mxu0 0.0
    %332 = vmatpush1.msra.mxu0 %v196
    %333 = vmatprep.subr.mxu0 0.0
    %334 = vmatpush1.msra.mxu0 %v197
    %335 = vmatprep.subr.mxu0 0.0
    %336 = vmatpush1.msra.mxu0 %v198
    %337 = vmatprep.subr.mxu0 0.0
    %338 = vmatpush1.msra.mxu0 0.0
    %339 = vmatprep.subr.mxu0 0.0
    %340 = vmatpush1.msra.mxu0 0.0
    %341 = vmatprep.subr.mxu0 0.0
    %342 = vmatpush1.msra.mxu0 0.0
    %343 = vmatprep.subr.mxu0 0.0
    %344 = vmatpush1.msra.mxu0 0.0
    %345 = vmatprep.subr.mxu0 0.0
    %346 = vmatpush1.msra.mxu0 0.0
    %347 = vmatprep.subr.mxu0 0.0
    %348 = vmatpush1.msra.mxu0 0.0
    %349 = vmatprep.subr.mxu0 0.0
    %350 = vmatpush1.msra.mxu0 0.0
    %351 = vmatprep.subr.mxu0 0.0
    %352 = vmatpush1.msra.mxu0 0.0
    %353 = vmatprep.subr.mxu0 0.0
    %354 = vmatpush1.msra.mxu0 0.0
    %355 = vmatprep.subr.mxu0 0.0
    %356 = vmatpush1.msra.mxu0 0.0
    %357 = vmatprep.subr.mxu0 0.0
    %358 = vmatpush1.msra.mxu0 0.0
    %359 = vmatprep.subr.mxu0 0.0
    %360 = vmatpush1.msra.mxu0 0.0
    %361 = vmatprep.subr.mxu0 0.0
    %362 = vmatpush1.msra.mxu0 0.0
    %363 = vmatprep.subr.mxu0 0.0
    %364 = vmatpush1.msra.mxu0 0.0
    %365 = vmatprep.subr.mxu0 0.0
    %366 = vmatpush1.msra.mxu0 0.0
    %367 = vmatprep.subr.mxu0 0.0
    %368 = vmatpush1.msra.mxu0 0.0
    %369 = vmatprep.subr.mxu0 0.0
    %370 = vmatpush1.msra.mxu0 0.0
    %371 = vmatprep.subr.mxu0 0.0
    %372 = vmatpush1.msra.mxu0 0.0
    %373 = vmatprep.subr.mxu0 0.0
    %374 = vmatpush1.msra.mxu0 0.0
    %375 = vmatprep.subr.mxu0 0.0
    %376 = vmatpush1.msra.mxu0 0.0
    %377 = vmatprep.subr.mxu0 0.0
    %378 = vmatpush1.msra.mxu0 0.0
    %379 = vmatprep.subr.mxu0 0.0
    %380 = vmatpush1.msra.mxu0 0.0
    %381 = vmatprep.subr.mxu0 0.0
    %382 = vmatpush1.msra.mxu0 0.0
    %383 = vmatprep.subr.mxu0 0.0
    %384 = vmatpush1.msra.mxu0 0.0
    %385 = vmatprep.subr.mxu0 0.0
    %386 = vmatpush1.msra.mxu0 0.0
    %387 = vmatprep.subr.mxu0 0.0
    %388 = vmatpush1.msra.mxu0 0.0
    %389 = vmatprep.subr.mxu0 0.0
    %390 = vmatpush1.msra.mxu0 0.0
    %391 = vmatprep.subr.mxu0 0.0
    %392 = vmatpush1.msra.mxu0 0.0
    %393 = vmatprep.mubr.f32.mxu0 0.0
    %394 = vmatmul.mubr.f32.gmra.mrb[0].mxu0 %v327
    %v395 = vpop.f32.mrb[0].mxu0
    %v396 = vadd.f32 0.0, %v395
    %v397 = vpop.f32.mrb[0].mxu0
    %398 = vdwg.mxu0
    %v399 = vadd.f32 %v323, %v396
    %v400 = vxor.u32 %v399, 2147483648
    %v401 = vmul.f32 %v400, 1.442695
    %v402 = vpow.pop %v401
    %v403 = vadd.f32 %v402, 1.0
    %v404 = vrcp.pop %v403
    %v405 = vmul.f32 1.0, %v404
    %v406 = vadd.f32 %v396, %v289
    %408 = vrot.lane.b32.xlu0 %v406, 64
    %v409 = vpop.permute.xlu0 %408
    %v411 = vmul.f32 %v405, %v409
    %413 = vrot.lane.b32.xlu0 %v411, 64
    %v414 = vpop.permute.xlu0 %413
    %v416 = vadd.f32 %v323, %v414
    %v417 = vtanh.pop %v416
    %v418 = vsub.f32 1.0, %v405
    %420 = vrot.lane.b32.xlu0 %v417, 96
    %v421 = vpop.permute.xlu0 %420
    %v423 = vmul.f32 %v418, %v421
    %v424 = vmul.f32 %v405, %v321
    %v425 = vadd.f32 %v423, %v424
    %s426 = sadd.s32 %s205, 1
    %v427 = vstv %s426
    %vm428 = vcmp.lt.s32.totalorder %v427, %v194
    %v429 = vsel %vm428, 1, 0
    %430 = vset.pattern.permute.xlu0 0
    %431 = vperm.xlu0 %430, %v429
    %v432 = vpop.permute.xlu0 %431
    %vm433 = vcmp.eq.s32.totalorder %v432, 1
    %v434 = vsel %vm433, %v425, %v321
    %s435 = scalar_lea.vmem [#allocation3], 16
    %v436 = vld [vmem:[%s435] sm:$0xff]
    %438 = vrot.lane.b32.xlu0 %v434, 96
    %v439 = vpop.permute.xlu0 %438
    %v440 = vsel %vm55, %v439, 0
    %442 = vmatprep.subr.mxu0 0.0
    %443 = vmatpush1.msra.mxu0 %v195
    %444 = vmatprep.subr.mxu0 0.0
    %445 = vmatpush1.msra.mxu0 %v196
    %446 = vmatprep.subr.mxu0 0.0
    %447 = vmatpush1.msra.mxu0 %v197
    %448 = vmatprep.subr.mxu0 0.0
    %449 = vmatpush1.msra.mxu0 %v198
    %450 = vmatprep.subr.mxu0 0.0
    %451 = vmatpush1.msra.mxu0 0.0
    %452 = vmatprep.subr.mxu0 0.0
    %453 = vmatpush1.msra.mxu0 0.0
    %454 = vmatprep.subr.mxu0 0.0
    %455 = vmatpush1.msra.mxu0 0.0
    %456 = vmatprep.subr.mxu0 0.0
    %457 = vmatpush1.msra.mxu0 0.0
    %458 = vmatprep.subr.mxu0 0.0
    %459 = vmatpush1.msra.mxu0 0.0
    %460 = vmatprep.subr.mxu0 0.0
    %461 = vmatpush1.msra.mxu0 0.0
    %462 = vmatprep.subr.mxu0 0.0
    %463 = vmatpush1.msra.mxu0 0.0
    %464 = vmatprep.subr.mxu0 0.0
    %465 = vmatpush1.msra.mxu0 0.0
    %466 = vmatprep.subr.mxu0 0.0
    %467 = vmatpush1.msra.mxu0 0.0
    %468 = vmatprep.subr.mxu0 0.0
    %469 = vmatpush1.msra.mxu0 0.0
    %470 = vmatprep.subr.mxu0 0.0
    %471 = vmatpush1.msra.mxu0 0.0
    %472 = vmatprep.subr.mxu0 0.0
    %473 = vmatpush1.msra.mxu0 0.0
    %474 = vmatprep.subr.mxu0 0.0
    %475 = vmatpush1.msra.mxu0 0.0
    %476 = vmatprep.subr.mxu0 0.0
    %477 = vmatpush1.msra.mxu0 0.0
    %478 = vmatprep.subr.mxu0 0.0
    %479 = vmatpush1.msra.mxu0 0.0
    %480 = vmatprep.subr.mxu0 0.0
    %481 = vmatpush1.msra.mxu0 0.0
    %482 = vmatprep.subr.mxu0 0.0
    %483 = vmatpush1.msra.mxu0 0.0
    %484 = vmatprep.subr.mxu0 0.0
    %485 = vmatpush1.msra.mxu0 0.0
    %486 = vmatprep.subr.mxu0 0.0
    %487 = vmatpush1.msra.mxu0 0.0
    %488 = vmatprep.subr.mxu0 0.0
    %489 = vmatpush1.msra.mxu0 0.0
    %490 = vmatprep.subr.mxu0 0.0
    %491 = vmatpush1.msra.mxu0 0.0
    %492 = vmatprep.subr.mxu0 0.0
    %493 = vmatpush1.msra.mxu0 0.0
    %494 = vmatprep.subr.mxu0 0.0
    %495 = vmatpush1.msra.mxu0 0.0
    %496 = vmatprep.subr.mxu0 0.0
    %497 = vmatpush1.msra.mxu0 0.0
    %498 = vmatprep.subr.mxu0 0.0
    %499 = vmatpush1.msra.mxu0 0.0
    %500 = vmatprep.subr.mxu0 0.0
    %501 = vmatpush1.msra.mxu0 0.0
    %502 = vmatprep.subr.mxu0 0.0
    %503 = vmatpush1.msra.mxu0 0.0
    %504 = vmatprep.subr.mxu0 0.0
    %505 = vmatpush1.msra.mxu0 0.0
    %506 = vmatprep.mubr.f32.mxu0 0.0
    %507 = vmatmul.mubr.f32.gmra.mrb[0].mxu0 %v440
    %v508 = vpop.f32.mrb[0].mxu0
    %v509 = vadd.f32 0.0, %v508
    %v510 = vpop.f32.mrb[0].mxu0
    %511 = vdwg.mxu0
    %v512 = vadd.f32 %v436, %v509
    %v513 = vxor.u32 %v512, 2147483648
    %v514 = vmul.f32 %v513, 1.442695
    %v515 = vpow.pop %v514
    %v516 = vadd.f32 %v515, 1.0
    %v517 = vrcp.pop %v516
    %v518 = vmul.f32 1.0, %v517
    %v519 = vadd.f32 %v509, %v289
    %521 = vrot.lane.b32.xlu0 %v519, 64
    %v522 = vpop.permute.xlu0 %521
    %v524 = vmul.f32 %v518, %v522
    %526 = vrot.lane.b32.xlu0 %v524, 64
    %v527 = vpop.permute.xlu0 %526
    %v529 = vadd.f32 %v436, %v527
    %v530 = vtanh.pop %v529
    %v531 = vsub.f32 1.0, %v518
    %533 = vrot.lane.b32.xlu0 %v530, 96
    %v534 = vpop.permute.xlu0 %533
    %v536 = vmul.f32 %v531, %v534
    %v537 = vmul.f32 %v518, %v434
    %v538 = vadd.f32 %v536, %v537
    %s539 = sadd.s32 %s205, 2
    %v540 = vstv %s539
    %vm541 = vcmp.lt.s32.totalorder %v540, %v194
    %v542 = vsel %vm541, 1, 0
    %543 = vset.pattern.permute.xlu0 0
    %544 = vperm.xlu0 %543, %v542
    %v545 = vpop.permute.xlu0 %544
    %vm546 = vcmp.eq.s32.totalorder %v545, 1
    %v547 = vsel %vm546, %v538, %v434
    %s548 = scalar_lea.vmem [#allocation3], 24
    %v549 = vld [vmem:[%s548] sm:$0xff]
    %551 = vrot.lane.b32.xlu0 %v547, 96
    %v552 = vpop.permute.xlu0 %551
    %v553 = vsel %vm55, %v552, 0
    %555 = vmatprep.subr.mxu0 0.0
    %556 = vmatpush1.msra.mxu0 %v195
    %557 = vmatprep.subr.mxu0 0.0
    %558 = vmatpush1.msra.mxu0 %v196
    %559 = vmatprep.subr.mxu0 0.0
    %560 = vmatpush1.msra.mxu0 %v197
    %561 = vmatprep.subr.mxu0 0.0
    %562 = vmatpush1.msra.mxu0 %v198
    %563 = vmatprep.subr.mxu0 0.0
    %564 = vmatpush1.msra.mxu0 0.0
    %565 = vmatprep.subr.mxu0 0.0
    %566 = vmatpush1.msra.mxu0 0.0
    %567 = vmatprep.subr.mxu0 0.0
    %568 = vmatpush1.msra.mxu0 0.0
    %569 = vmatprep.subr.mxu0 0.0
    %570 = vmatpush1.msra.mxu0 0.0
    %571 = vmatprep.subr.mxu0 0.0
    %572 = vmatpush1.msra.mxu0 0.0
    %573 = vmatprep.subr.mxu0 0.0
    %574 = vmatpush1.msra.mxu0 0.0
    %575 = vmatprep.subr.mxu0 0.0
    %576 = vmatpush1.msra.mxu0 0.0
    %577 = vmatprep.subr.mxu0 0.0
    %578 = vmatpush1.msra.mxu0 0.0
    %579 = vmatprep.subr.mxu0 0.0
    %580 = vmatpush1.msra.mxu0 0.0
    %581 = vmatprep.subr.mxu0 0.0
    %582 = vmatpush1.msra.mxu0 0.0
    %583 = vmatprep.subr.mxu0 0.0
    %584 = vmatpush1.msra.mxu0 0.0
    %585 = vmatprep.subr.mxu0 0.0
    %586 = vmatpush1.msra.mxu0 0.0
    %587 = vmatprep.subr.mxu0 0.0
    %588 = vmatpush1.msra.mxu0 0.0
    %589 = vmatprep.subr.mxu0 0.0
    %590 = vmatpush1.msra.mxu0 0.0
    %591 = vmatprep.subr.mxu0 0.0
    %592 = vmatpush1.msra.mxu0 0.0
    %593 = vmatprep.subr.mxu0 0.0
    %594 = vmatpush1.msra.mxu0 0.0
    %595 = vmatprep.subr.mxu0 0.0
    %596 = vmatpush1.msra.mxu0 0.0
    %597 = vmatprep.subr.mxu0 0.0
    %598 = vmatpush1.msra.mxu0 0.0
    %599 = vmatprep.subr.mxu0 0.0
    %600 = vmatpush1.msra.mxu0 0.0
    %601 = vmatprep.subr.mxu0 0.0
    %602 = vmatpush1.msra.mxu0 0.0
    %603 = vmatprep.subr.mxu0 0.0
    %604 = vmatpush1.msra.mxu0 0.0
    %605 = vmatprep.subr.mxu0 0.0
    %606 = vmatpush1.msra.mxu0 0.0
    %607 = vmatprep.subr.mxu0 0.0
    %608 = vmatpush1.msra.mxu0 0.0
    %609 = vmatprep.subr.mxu0 0.0
    %610 = vmatpush1.msra.mxu0 0.0
    %611 = vmatprep.subr.mxu0 0.0
    %612 = vmatpush1.msra.mxu0 0.0
    %613 = vmatprep.subr.mxu0 0.0
    %614 = vmatpush1.msra.mxu0 0.0
    %615 = vmatprep.subr.mxu0 0.0
    %616 = vmatpush1.msra.mxu0 0.0
    %617 = vmatprep.subr.mxu0 0.0
    %618 = vmatpush1.msra.mxu0 0.0
    %619 = vmatprep.mubr.f32.mxu0 0.0
    %620 = vmatmul.mubr.f32.gmra.mrb[0].mxu0 %v553
    %v621 = vpop.f32.mrb[0].mxu0
    %v622 = vadd.f32 0.0, %v621
    %v623 = vpop.f32.mrb[0].mxu0
    %624 = vdwg.mxu0
    %v625 = vadd.f32 %v549, %v622
    %v626 = vxor.u32 %v625, 2147483648
    %v627 = vmul.f32 %v626, 1.442695
    %v628 = vpow.pop %v627
    %v629 = vadd.f32 %v628, 1.0
    %v630 = vrcp.pop %v629
    %v631 = vmul.f32 1.0, %v630
    %v632 = vadd.f32 %v622, %v289
    %634 = vrot.lane.b32.xlu0 %v632, 64
    %v635 = vpop.permute.xlu0 %634
    %v637 = vmul.f32 %v631, %v635
    %639 = vrot.lane.b32.xlu0 %v637, 64
    %v640 = vpop.permute.xlu0 %639
    %v642 = vadd.f32 %v549, %v640
    %v643 = vtanh.pop %v642
    %v644 = vsub.f32 1.0, %v631
    %646 = vrot.lane.b32.xlu0 %v643, 96
    %v647 = vpop.permute.xlu0 %646
    %v649 = vmul.f32 %v644, %v647
    %v650 = vmul.f32 %v631, %v547
    %v651 = vadd.f32 %v649, %v650
    %s652 = sadd.s32 %s205, 3
    %v653 = vstv %s652
    %vm654 = vcmp.lt.s32.totalorder %v653, %v194
    %v655 = vsel %vm654, 1, 0
    %656 = vset.pattern.permute.xlu0 0
    %657 = vperm.xlu0 %656, %v655
    %v658 = vpop.permute.xlu0 %657
    %vm659 = vcmp.eq.s32.totalorder %v658, 1
    %v660 = vsel %vm659, %v651, %v547
    %s661 = scalar_lea.vmem [#allocation3], 32
    %v662 = vld [vmem:[%s661] sm:$0xff]
    %664 = vrot.lane.b32.xlu0 %v660, 96
    %v665 = vpop.permute.xlu0 %664
    %v666 = vsel %vm55, %v665, 0
    %668 = vmatprep.subr.mxu0 0.0
    %669 = vmatpush1.msra.mxu0 %v195
    %670 = vmatprep.subr.mxu0 0.0
    %671 = vmatpush1.msra.mxu0 %v196
    %672 = vmatprep.subr.mxu0 0.0
    %673 = vmatpush1.msra.mxu0 %v197
    %674 = vmatprep.subr.mxu0 0.0
    %675 = vmatpush1.msra.mxu0 %v198
    %676 = vmatprep.subr.mxu0 0.0
    %677 = vmatpush1.msra.mxu0 0.0
    %678 = vmatprep.subr.mxu0 0.0
    %679 = vmatpush1.msra.mxu0 0.0
    %680 = vmatprep.subr.mxu0 0.0
    %681 = vmatpush1.msra.mxu0 0.0
    %682 = vmatprep.subr.mxu0 0.0
    %683 = vmatpush1.msra.mxu0 0.0
    %684 = vmatprep.subr.mxu0 0.0
    %685 = vmatpush1.msra.mxu0 0.0
    %686 = vmatprep.subr.mxu0 0.0
    %687 = vmatpush1.msra.mxu0 0.0
    %688 = vmatprep.subr.mxu0 0.0
    %689 = vmatpush1.msra.mxu0 0.0
    %690 = vmatprep.subr.mxu0 0.0
    %691 = vmatpush1.msra.mxu0 0.0
    %692 = vmatprep.subr.mxu0 0.0
    %693 = vmatpush1.msra.mxu0 0.0
    %694 = vmatprep.subr.mxu0 0.0
    %695 = vmatpush1.msra.mxu0 0.0
    %696 = vmatprep.subr.mxu0 0.0
    %697 = vmatpush1.msra.mxu0 0.0
    %698 = vmatprep.subr.mxu0 0.0
    %699 = vmatpush1.msra.mxu0 0.0
    %700 = vmatprep.subr.mxu0 0.0
    %701 = vmatpush1.msra.mxu0 0.0
    %702 = vmatprep.subr.mxu0 0.0
    %703 = vmatpush1.msra.mxu0 0.0
    %704 = vmatprep.subr.mxu0 0.0
    %705 = vmatpush1.msra.mxu0 0.0
    %706 = vmatprep.subr.mxu0 0.0
    %707 = vmatpush1.msra.mxu0 0.0
    %708 = vmatprep.subr.mxu0 0.0
    %709 = vmatpush1.msra.mxu0 0.0
    %710 = vmatprep.subr.mxu0 0.0
    %711 = vmatpush1.msra.mxu0 0.0
    %712 = vmatprep.subr.mxu0 0.0
    %713 = vmatpush1.msra.mxu0 0.0
    %714 = vmatprep.subr.mxu0 0.0
    %715 = vmatpush1.msra.mxu0 0.0
    %716 = vmatprep.subr.mxu0 0.0
    %717 = vmatpush1.msra.mxu0 0.0
    %718 = vmatprep.subr.mxu0 0.0
    %719 = vmatpush1.msra.mxu0 0.0
    %720 = vmatprep.subr.mxu0 0.0
    %721 = vmatpush1.msra.mxu0 0.0
    %722 = vmatprep.subr.mxu0 0.0
    %723 = vmatpush1.msra.mxu0 0.0
    %724 = vmatprep.subr.mxu0 0.0
    %725 = vmatpush1.msra.mxu0 0.0
    %726 = vmatprep.subr.mxu0 0.0
    %727 = vmatpush1.msra.mxu0 0.0
    %728 = vmatprep.subr.mxu0 0.0
    %729 = vmatpush1.msra.mxu0 0.0
    %730 = vmatprep.subr.mxu0 0.0
    %731 = vmatpush1.msra.mxu0 0.0
    %732 = vmatprep.mubr.f32.mxu0 0.0
    %733 = vmatmul.mubr.f32.gmra.mrb[0].mxu0 %v666
    %v734 = vpop.f32.mrb[0].mxu0
    %v735 = vadd.f32 0.0, %v734
    %v736 = vpop.f32.mrb[0].mxu0
    %737 = vdwg.mxu0
    %v738 = vadd.f32 %v662, %v735
    %v739 = vxor.u32 %v738, 2147483648
    %v740 = vmul.f32 %v739, 1.442695
    %v741 = vpow.pop %v740
    %v742 = vadd.f32 %v741, 1.0
    %v743 = vrcp.pop %v742
    %v744 = vmul.f32 1.0, %v743
    %v745 = vadd.f32 %v735, %v289
    %747 = vrot.lane.b32.xlu0 %v745, 64
    %v748 = vpop.permute.xlu0 %747
    %v750 = vmul.f32 %v744, %v748
    %752 = vrot.lane.b32.xlu0 %v750, 64
    %v753 = vpop.permute.xlu0 %752
    %v755 = vadd.f32 %v662, %v753
    %v756 = vtanh.pop %v755
    %v757 = vsub.f32 1.0, %v744
    %759 = vrot.lane.b32.xlu0 %v756, 96
    %v760 = vpop.permute.xlu0 %759
    %v762 = vmul.f32 %v757, %v760
    %v763 = vmul.f32 %v744, %v660
    %v764 = vadd.f32 %v762, %v763
    %s765 = sadd.s32 %s205, 4
    %v766 = vstv %s765
    %vm767 = vcmp.lt.s32.totalorder %v766, %v194
    %v768 = vsel %vm767, 1, 0
    %769 = vset.pattern.permute.xlu0 0
    %770 = vperm.xlu0 %769, %v768
    %v771 = vpop.permute.xlu0 %770
    %vm772 = vcmp.eq.s32.totalorder %v771, 1
    %v773 = vsel %vm772, %v764, %v660
    %s774 = scalar_lea.vmem [#allocation3], 40
    %v775 = vld [vmem:[%s774] sm:$0xff]
    %777 = vrot.lane.b32.xlu0 %v773, 96
    %v778 = vpop.permute.xlu0 %777
    %v779 = vsel %vm55, %v778, 0
    %781 = vmatprep.subr.mxu0 0.0
    %782 = vmatpush1.msra.mxu0 %v195
    %783 = vmatprep.subr.mxu0 0.0
    %784 = vmatpush1.msra.mxu0 %v196
    %785 = vmatprep.subr.mxu0 0.0
    %786 = vmatpush1.msra.mxu0 %v197
    %787 = vmatprep.subr.mxu0 0.0
    %788 = vmatpush1.msra.mxu0 %v198
    %789 = vmatprep.subr.mxu0 0.0
    %790 = vmatpush1.msra.mxu0 0.0
    %791 = vmatprep.subr.mxu0 0.0
    %792 = vmatpush1.msra.mxu0 0.0
    %793 = vmatprep.subr.mxu0 0.0
    %794 = vmatpush1.msra.mxu0 0.0
    %795 = vmatprep.subr.mxu0 0.0
    %796 = vmatpush1.msra.mxu0 0.0
    %797 = vmatprep.subr.mxu0 0.0
    %798 = vmatpush1.msra.mxu0 0.0
    %799 = vmatprep.subr.mxu0 0.0
    %800 = vmatpush1.msra.mxu0 0.0
    %801 = vmatprep.subr.mxu0 0.0
    %802 = vmatpush1.msra.mxu0 0.0
    %803 = vmatprep.subr.mxu0 0.0
    %804 = vmatpush1.msra.mxu0 0.0
    %805 = vmatprep.subr.mxu0 0.0
    %806 = vmatpush1.msra.mxu0 0.0
    %807 = vmatprep.subr.mxu0 0.0
    %808 = vmatpush1.msra.mxu0 0.0
    %809 = vmatprep.subr.mxu0 0.0
    %810 = vmatpush1.msra.mxu0 0.0
    %811 = vmatprep.subr.mxu0 0.0
    %812 = vmatpush1.msra.mxu0 0.0
    %813 = vmatprep.subr.mxu0 0.0
    %814 = vmatpush1.msra.mxu0 0.0
    %815 = vmatprep.subr.mxu0 0.0
    %816 = vmatpush1.msra.mxu0 0.0
    %817 = vmatprep.subr.mxu0 0.0
    %818 = vmatpush1.msra.mxu0 0.0
    %819 = vmatprep.subr.mxu0 0.0
    %820 = vmatpush1.msra.mxu0 0.0
    %821 = vmatprep.subr.mxu0 0.0
    %822 = vmatpush1.msra.mxu0 0.0
    %823 = vmatprep.subr.mxu0 0.0
    %824 = vmatpush1.msra.mxu0 0.0
    %825 = vmatprep.subr.mxu0 0.0
    %826 = vmatpush1.msra.mxu0 0.0
    %827 = vmatprep.subr.mxu0 0.0
    %828 = vmatpush1.msra.mxu0 0.0
    %829 = vmatprep.subr.mxu0 0.0
    %830 = vmatpush1.msra.mxu0 0.0
    %831 = vmatprep.subr.mxu0 0.0
    %832 = vmatpush1.msra.mxu0 0.0
    %833 = vmatprep.subr.mxu0 0.0
    %834 = vmatpush1.msra.mxu0 0.0
    %835 = vmatprep.subr.mxu0 0.0
    %836 = vmatpush1.msra.mxu0 0.0
    %837 = vmatprep.subr.mxu0 0.0
    %838 = vmatpush1.msra.mxu0 0.0
    %839 = vmatprep.subr.mxu0 0.0
    %840 = vmatpush1.msra.mxu0 0.0
    %841 = vmatprep.subr.mxu0 0.0
    %842 = vmatpush1.msra.mxu0 0.0
    %843 = vmatprep.subr.mxu0 0.0
    %844 = vmatpush1.msra.mxu0 0.0
    %845 = vmatprep.mubr.f32.mxu0 0.0
    %846 = vmatmul.mubr.f32.gmra.mrb[0].mxu0 %v779
    %v847 = vpop.f32.mrb[0].mxu0
    %v848 = vadd.f32 0.0, %v847
    %v849 = vpop.f32.mrb[0].mxu0
    %850 = vdwg.mxu0
    %v851 = vadd.f32 %v775, %v848
    %v852 = vxor.u32 %v851, 2147483648
    %v853 = vmul.f32 %v852, 1.442695
    %v854 = vpow.pop %v853
    %v855 = vadd.f32 %v854, 1.0
    %v856 = vrcp.pop %v855
    %v857 = vmul.f32 1.0, %v856
    %v858 = vadd.f32 %v848, %v289
    %860 = vrot.lane.b32.xlu0 %v858, 64
    %v861 = vpop.permute.xlu0 %860
    %v863 = vmul.f32 %v857, %v861
    %865 = vrot.lane.b32.xlu0 %v863, 64
    %v866 = vpop.permute.xlu0 %865
    %v868 = vadd.f32 %v775, %v866
    %v869 = vtanh.pop %v868
    %v870 = vsub.f32 1.0, %v857
    %872 = vrot.lane.b32.xlu0 %v869, 96
    %v873 = vpop.permute.xlu0 %872
    %v875 = vmul.f32 %v870, %v873
    %v876 = vmul.f32 %v857, %v773
    %v877 = vadd.f32 %v875, %v876
    %s878 = sadd.s32 %s205, 5
    %v879 = vstv %s878
    %vm880 = vcmp.lt.s32.totalorder %v879, %v194
    %v881 = vsel %vm880, 1, 0
    %882 = vset.pattern.permute.xlu0 0
    %883 = vperm.xlu0 %882, %v881
    %v884 = vpop.permute.xlu0 %883
    %vm885 = vcmp.eq.s32.totalorder %v884, 1
    %v886 = vsel %vm885, %v877, %v773
    %s887 = scalar_lea.vmem [#allocation3], 48
    %v888 = vld [vmem:[%s887] sm:$0xff]
    %890 = vrot.lane.b32.xlu0 %v886, 96
    %v891 = vpop.permute.xlu0 %890
    %v892 = vsel %vm55, %v891, 0
    %894 = vmatprep.subr.mxu0 0.0
    %895 = vmatpush1.msra.mxu0 %v195
    %896 = vmatprep.subr.mxu0 0.0
    %897 = vmatpush1.msra.mxu0 %v196
    %898 = vmatprep.subr.mxu0 0.0
    %899 = vmatpush1.msra.mxu0 %v197
    %900 = vmatprep.subr.mxu0 0.0
    %901 = vmatpush1.msra.mxu0 %v198
    %902 = vmatprep.subr.mxu0 0.0
    %903 = vmatpush1.msra.mxu0 0.0
    %904 = vmatprep.subr.mxu0 0.0
    %905 = vmatpush1.msra.mxu0 0.0
    %906 = vmatprep.subr.mxu0 0.0
    %907 = vmatpush1.msra.mxu0 0.0
    %908 = vmatprep.subr.mxu0 0.0
    %909 = vmatpush1.msra.mxu0 0.0
    %910 = vmatprep.subr.mxu0 0.0
    %911 = vmatpush1.msra.mxu0 0.0
    %912 = vmatprep.subr.mxu0 0.0
    %913 = vmatpush1.msra.mxu0 0.0
    %914 = vmatprep.subr.mxu0 0.0
    %915 = vmatpush1.msra.mxu0 0.0
    %916 = vmatprep.subr.mxu0 0.0
    %917 = vmatpush1.msra.mxu0 0.0
    %918 = vmatprep.subr.mxu0 0.0
    %919 = vmatpush1.msra.mxu0 0.0
    %920 = vmatprep.subr.mxu0 0.0
    %921 = vmatpush1.msra.mxu0 0.0
    %922 = vmatprep.subr.mxu0 0.0
    %923 = vmatpush1.msra.mxu0 0.0
    %924 = vmatprep.subr.mxu0 0.0
    %925 = vmatpush1.msra.mxu0 0.0
    %926 = vmatprep.subr.mxu0 0.0
    %927 = vmatpush1.msra.mxu0 0.0
    %928 = vmatprep.subr.mxu0 0.0
    %929 = vmatpush1.msra.mxu0 0.0
    %930 = vmatprep.subr.mxu0 0.0
    %931 = vmatpush1.msra.mxu0 0.0
    %932 = vmatprep.subr.mxu0 0.0
    %933 = vmatpush1.msra.mxu0 0.0
    %934 = vmatprep.subr.mxu0 0.0
    %935 = vmatpush1.msra.mxu0 0.0
    %936 = vmatprep.subr.mxu0 0.0
    %937 = vmatpush1.msra.mxu0 0.0
    %938 = vmatprep.subr.mxu0 0.0
    %939 = vmatpush1.msra.mxu0 0.0
    %940 = vmatprep.subr.mxu0 0.0
    %941 = vmatpush1.msra.mxu0 0.0
    %942 = vmatprep.subr.mxu0 0.0
    %943 = vmatpush1.msra.mxu0 0.0
    %944 = vmatprep.subr.mxu0 0.0
    %945 = vmatpush1.msra.mxu0 0.0
    %946 = vmatprep.subr.mxu0 0.0
    %947 = vmatpush1.msra.mxu0 0.0
    %948 = vmatprep.subr.mxu0 0.0
    %949 = vmatpush1.msra.mxu0 0.0
    %950 = vmatprep.subr.mxu0 0.0
    %951 = vmatpush1.msra.mxu0 0.0
    %952 = vmatprep.subr.mxu0 0.0
    %953 = vmatpush1.msra.mxu0 0.0
    %954 = vmatprep.subr.mxu0 0.0
    %955 = vmatpush1.msra.mxu0 0.0
    %956 = vmatprep.subr.mxu0 0.0
    %957 = vmatpush1.msra.mxu0 0.0
    %958 = vmatprep.mubr.f32.mxu0 0.0
    %959 = vmatmul.mubr.f32.gmra.mrb[0].mxu0 %v892
    %v960 = vpop.f32.mrb[0].mxu0
    %v961 = vadd.f32 0.0, %v960
    %v962 = vpop.f32.mrb[0].mxu0
    %963 = vdwg.mxu0
    %v964 = vadd.f32 %v888, %v961
    %v965 = vxor.u32 %v964, 2147483648
    %v966 = vmul.f32 %v965, 1.442695
    %v967 = vpow.pop %v966
    %v968 = vadd.f32 %v967, 1.0
    %v969 = vrcp.pop %v968
    %v970 = vmul.f32 1.0, %v969
    %v971 = vadd.f32 %v961, %v289
    %973 = vrot.lane.b32.xlu0 %v971, 64
    %v974 = vpop.permute.xlu0 %973
    %v976 = vmul.f32 %v970, %v974
    %978 = vrot.lane.b32.xlu0 %v976, 64
    %v979 = vpop.permute.xlu0 %978
    %v981 = vadd.f32 %v888, %v979
    %v982 = vtanh.pop %v981
    %v983 = vsub.f32 1.0, %v970
    %985 = vrot.lane.b32.xlu0 %v982, 96
    %v986 = vpop.permute.xlu0 %985
    %v988 = vmul.f32 %v983, %v986
    %v989 = vmul.f32 %v970, %v886
    %v990 = vadd.f32 %v988, %v989
    %s991 = sadd.s32 %s205, 6
    %v992 = vstv %s991
    %vm993 = vcmp.lt.s32.totalorder %v992, %v194
    %v994 = vsel %vm993, 1, 0
    %995 = vset.pattern.permute.xlu0 0
    %996 = vperm.xlu0 %995, %v994
    %v997 = vpop.permute.xlu0 %996
    %vm998 = vcmp.eq.s32.totalorder %v997, 1
    %v999 = vsel %vm998, %v990, %v886
    %s1000 = scalar_lea.vmem [#allocation3], 56
    %v1001 = vld [vmem:[%s1000] sm:$0xff]
    %1003 = vrot.lane.b32.xlu0 %v999, 96
    %v1004 = vpop.permute.xlu0 %1003
    %v1005 = vsel %vm55, %v1004, 0
    %1007 = vmatprep.subr.mxu0 0.0
    %1008 = vmatpush1.msra.mxu0 %v195
    %1009 = vmatprep.subr.mxu0 0.0
    %1010 = vmatpush1.msra.mxu0 %v196
    %1011 = vmatprep.subr.mxu0 0.0
    %1012 = vmatpush1.msra.mxu0 %v197
    %1013 = vmatprep.subr.mxu0 0.0
    %1014 = vmatpush1.msra.mxu0 %v198
    %1015 = vmatprep.subr.mxu0 0.0
    %1016 = vmatpush1.msra.mxu0 0.0
    %1017 = vmatprep.subr.mxu0 0.0
    %1018 = vmatpush1.msra.mxu0 0.0
    %1019 = vmatprep.subr.mxu0 0.0
    %1020 = vmatpush1.msra.mxu0 0.0
    %1021 = vmatprep.subr.mxu0 0.0
    %1022 = vmatpush1.msra.mxu0 0.0
    %1023 = vmatprep.subr.mxu0 0.0
    %1024 = vmatpush1.msra.mxu0 0.0
    %1025 = vmatprep.subr.mxu0 0.0
    %1026 = vmatpush1.msra.mxu0 0.0
    %1027 = vmatprep.subr.mxu0 0.0
    %1028 = vmatpush1.msra.mxu0 0.0
    %1029 = vmatprep.subr.mxu0 0.0
    %1030 = vmatpush1.msra.mxu0 0.0
    %1031 = vmatprep.subr.mxu0 0.0
    %1032 = vmatpush1.msra.mxu0 0.0
    %1033 = vmatprep.subr.mxu0 0.0
    %1034 = vmatpush1.msra.mxu0 0.0
    %1035 = vmatprep.subr.mxu0 0.0
    %1036 = vmatpush1.msra.mxu0 0.0
    %1037 = vmatprep.subr.mxu0 0.0
    %1038 = vmatpush1.msra.mxu0 0.0
    %1039 = vmatprep.subr.mxu0 0.0
    %1040 = vmatpush1.msra.mxu0 0.0
    %1041 = vmatprep.subr.mxu0 0.0
    %1042 = vmatpush1.msra.mxu0 0.0
    %1043 = vmatprep.subr.mxu0 0.0
    %1044 = vmatpush1.msra.mxu0 0.0
    %1045 = vmatprep.subr.mxu0 0.0
    %1046 = vmatpush1.msra.mxu0 0.0
    %1047 = vmatprep.subr.mxu0 0.0
    %1048 = vmatpush1.msra.mxu0 0.0
    %1049 = vmatprep.subr.mxu0 0.0
    %1050 = vmatpush1.msra.mxu0 0.0
    %1051 = vmatprep.subr.mxu0 0.0
    %1052 = vmatpush1.msra.mxu0 0.0
    %1053 = vmatprep.subr.mxu0 0.0
    %1054 = vmatpush1.msra.mxu0 0.0
    %1055 = vmatprep.subr.mxu0 0.0
    %1056 = vmatpush1.msra.mxu0 0.0
    %1057 = vmatprep.subr.mxu0 0.0
    %1058 = vmatpush1.msra.mxu0 0.0
    %1059 = vmatprep.subr.mxu0 0.0
    %1060 = vmatpush1.msra.mxu0 0.0
    %1061 = vmatprep.subr.mxu0 0.0
    %1062 = vmatpush1.msra.mxu0 0.0
    %1063 = vmatprep.subr.mxu0 0.0
    %1064 = vmatpush1.msra.mxu0 0.0
    %1065 = vmatprep.subr.mxu0 0.0
    %1066 = vmatpush1.msra.mxu0 0.0
    %1067 = vmatprep.subr.mxu0 0.0
    %1068 = vmatpush1.msra.mxu0 0.0
    %1069 = vmatprep.subr.mxu0 0.0
    %1070 = vmatpush1.msra.mxu0 0.0
    %1071 = vmatprep.mubr.f32.mxu0 0.0
    %1072 = vmatmul.mubr.f32.gmra.mrb[0].mxu0 %v1005
    %v1073 = vpop.f32.mrb[0].mxu0
    %v1074 = vadd.f32 0.0, %v1073
    %v1075 = vpop.f32.mrb[0].mxu0
    %1076 = vdwg.mxu0
    %v1077 = vadd.f32 %v1001, %v1074
    %v1078 = vxor.u32 %v1077, 2147483648
    %v1079 = vmul.f32 %v1078, 1.442695
    %v1080 = vpow.pop %v1079
    %v1081 = vadd.f32 %v1080, 1.0
    %v1082 = vrcp.pop %v1081
    %v1083 = vmul.f32 1.0, %v1082
    %v1084 = vadd.f32 %v1074, %v289
    %1086 = vrot.lane.b32.xlu0 %v1084, 64
    %v1087 = vpop.permute.xlu0 %1086
    %v1089 = vmul.f32 %v1083, %v1087
    %1091 = vrot.lane.b32.xlu0 %v1089, 64
    %v1092 = vpop.permute.xlu0 %1091
    %v1094 = vadd.f32 %v1001, %v1092
    %v1095 = vtanh.pop %v1094
    %v1096 = vsub.f32 1.0, %v1083
    %1098 = vrot.lane.b32.xlu0 %v1095, 96
    %v1099 = vpop.permute.xlu0 %1098
    %v1101 = vmul.f32 %v1096, %v1099
    %v1102 = vmul.f32 %v1083, %v999
    %v1103 = vadd.f32 %v1101, %v1102
    %s1104 = sadd.s32 %s205, 7
    %v1105 = vstv %s1104
    %vm1106 = vcmp.lt.s32.totalorder %v1105, %v194
    %v1107 = vsel %vm1106, 1, 0
    %1108 = vset.pattern.permute.xlu0 0
    %1109 = vperm.xlu0 %1108, %v1107
    %v1110 = vpop.permute.xlu0 %1109
    %vm1111 = vcmp.eq.s32.totalorder %v1110, 1
    %v1112 = vsel %vm1111, %v1103, %v999
    %1114 = vrot.lane.b32.xlu0 %v1112, 96
    %v1115 = vpop.permute.xlu0 %1114
    %1117 = vst.msk [vmem:[#allocation2] sm:$0xff] %vm55, %v1115
    // Predicated region
    $region38: #{tpu_custom_call.1} parent=1 // pred_check
      %p1118 = pneg %p30
    $region39: #{tpu_custom_call.1} parent=1 // pred_check_branch
      %1120 = sbr.rel (%p1118) target = $region41
    $region40: #{tpu_custom_call.1} parent=1 // pred_region
      %v1121 = vld [vmem:[#allocation2] sm:$0xff]
      %1122 = vst.msk [vmem:[#allocation4] sm:$0xff] %vm55, %v1121
      %v1123 = vld [vmem:[%s6] sm:$0xff]
      %v1124 = vxor.u32 %v1123, 2147483648
      %v1125 = vmul.f32 %v1124, 1.442695
      %v1126 = vpow.pop %v1125
      %v1127 = vadd.f32 %v1126, 1.0
      %v1128 = vrcp.pop %v1127
      %v1129 = vmul.f32 1.0, %v1128
      %v1130 = vld [vmem:[%s7] sm:$0x1]
      %v1132 = vlaneseq
      %v1133 = vshrl.u32 %v1132, 7
      %v1134 = vsub.s32 0, %v1133
      %v1135 = vrot.slane %v1130, %v1134
      %v1137 = vmul.f32 %v1129, %v1135
      %1139 = vrot.lane.b32.xlu0 %v1137, 64
      %v1140 = vpop.permute.xlu0 %1139
      %v1142 = vadd.f32 %v1123, %v1140
      %v1143 = vtanh.pop %v1142
      %v1144 = vsub.f32 1.0, %v1129
      %1146 = vrot.lane.b32.xlu0 %v1143, 96
      %v1147 = vpop.permute.xlu0 %1146
      %v1149 = vmul.f32 %v1144, %v1147
      %vm1150 = vcmask 523520
      %1151 = vst.msk [vmem:[#allocation4] sm:$0xff] %vm1150, %v1149
    $region41: #{tpu_custom_call.1} parent=1 // pred_fallthru
      _
    // Predicated region
    $region42: #{tpu_custom_call.1} parent=1 // pred_check
      _
    $region43: #{tpu_custom_call.1} parent=1 // pred_check_branch
      %1153 = sbr.rel (0) target = $region45
    $region44: #{tpu_custom_call.1} parent=1 // pred_region
      %s1155 = ssub.s32 128, 128
      %1156 = vsyncadd [#allocation5], %s1155
      %s1158 = sshll.u32 [#allocation4], 4
      %s1159 = int_to_ptr.vmem [resolvable:$true] %s1158
      %1161 = dma.vmem_to_hbm [thread:$0]  %s1159, 128, %s8, [#allocation5]
    $region45: #{tpu_custom_call.1} parent=1 // pred_fallthru
      _
    // Predicated region
    $region46: #{tpu_custom_call.1} parent=1 // pred_check
      _
    $region47: #{tpu_custom_call.1} parent=1 // pred_check_branch
      %1163 = sbr.rel (0) target = $region49
    $region48: #{tpu_custom_call.1} parent=1 // pred_region
      %1164 = dma.done [#allocation5], 128
    $region49: #{tpu_custom_call.1} parent=1 // pred_fallthru
      _
    %1165 = vsyncpa [#allocation5], 1

</llo_original>
